<compile_context>
chip_gen: v7x
topology: tpu7x:2x2x1
jax: 0.10.0
libtpu: 0.0.40
codegen_flags: <defaults>
</compile_context>

<pallas_src>
import jax
import jax.numpy as jnp
from jax.experimental import pallas as pl
from jax.experimental.pallas import tpu as pltpu


def _round_up(x, m):
    return ((x + m - 1) // m) * m


_MAX_BLOCK_ROWS = 1024  # 2 x (1024 x 3712 x f32) ~ 30 MB double-buffered x tiles:
                        # fits v7x's 64 MiB physical VMEM with headroom.


def edge_head_kernel(x_ref, w1_ref, b1_ref, w2_ref, b2_ref, o_ref):
    # Dropout is identity in eval/inference mode.
    # In-kernel f32 -> bf16 cast: VPU work hidden under the x DMA (kernel is
    # HBM-bound); avoids a separate wrapper-side cast pass over HBM.
    x = x_ref[...].astype(jnp.bfloat16)                          # (tm, D_in)
    # dense: bf16 x bf16 -> f32 accumulate on the MXU.
    h = jnp.dot(x, w1_ref[...], preferred_element_type=jnp.float32)
    # f32 epilogue (bias + tanh).
    h = jnp.tanh(h + b1_ref[...])
    # out_proj: bf16 activations x bf16 weights -> f32 accumulate, f32 bias.
    out = jnp.dot(h.astype(w2_ref.dtype), w2_ref[...],
                  preferred_element_type=jnp.float32) + b2_ref[...]
    o_ref[...] = out.astype(o_ref.dtype)                         # (tm, n_pad) f32


def edge_classification_head(features, w1, b1, w2, b2, *, block_rows=None):
    """features: (B, 29*4*H); w1: (29*4*H, H); b1: (1, H) or (H,);
    w2: (H, 29); b2: (1, 29) or (29,).  Returns (B, 29) float32."""
    B, D_in = features.shape
    H = w1.shape[1]
    n_cls = w2.shape[1]
    assert w1.shape == (D_in, H)
    assert w2.shape == (H, n_cls)

    # Lane-dense output width (multiple of 128) -> unmasked vector stores.
    n_pad = _round_up(n_cls, 128)

    # Row-tile heuristic (see module docstring).
    if block_rows is None:
        if B <= 16:
            block_rows = _round_up(max(B, 1), 8)
        else:
            steps = 2 * pl.cdiv(B, 2 * _MAX_BLOCK_ROWS)           # even, >= 2
            block_rows = min(_MAX_BLOCK_ROWS, _round_up(pl.cdiv(B, steps), 8))
    block_rows = max(8, _round_up(block_rows, 8))

    # No wrapper-side bf16 cast and no pad-to-block_rows copy of `features`:
    # the kernel reads f32 rows straight from HBM; the grid is ragged (cdiv)
    # so at most (block_rows - 1) slack rows exist, only in the last tile.
    x = features
    Bp = B
    if B < block_rows:
        # Tiny batches only: pad up to one full tile so the block shape never
        # exceeds the array.
        x = jnp.pad(x, ((0, block_rows - B), (0, 0)))
        Bp = block_rows

    grid = (pl.cdiv(Bp, block_rows),)

    # Weights / biases: loaded once (constant index_maps), VMEM-resident.
    w1b = w1.astype(jnp.bfloat16)
    b1f = jnp.asarray(b1, jnp.float32).reshape(1, H)
    w2b = jnp.pad(jnp.asarray(w2, jnp.float32),
                  ((0, 0), (0, n_pad - n_cls))).astype(jnp.bfloat16)
    b2f = jnp.pad(jnp.asarray(b2, jnp.float32).reshape(1, n_cls),
                  ((0, 0), (0, n_pad - n_cls)))

    x_bytes = int(jnp.dtype(x.dtype).itemsize)
    resident_bytes = D_in * H * 2 + H * n_pad * 2 + (H + n_pad) * 4
    # Scoped VMEM: double-buffered x + out tiles plus resident weights/biases.
    vmem_needed = 2 * block_rows * (D_in * x_bytes + n_pad * 4) + resident_bytes
    vmem_limit = int(max(32 << 20, min(int(vmem_needed * 1.3), 56 << 20)))

    cost = pl.CostEstimate(
        flops=2 * Bp * (D_in * H + H * n_pad),
        transcendentals=Bp * H,
        bytes_accessed=Bp * D_in * x_bytes + Bp * n_pad * 4 + resident_bytes,
    )

    out = pl.pallas_call(
        edge_head_kernel,
        out_shape=jax.ShapeDtypeStruct((Bp, n_pad), jnp.float32),
        grid=grid,
        in_specs=[
            pl.BlockSpec((block_rows, D_in), lambda i: (i, 0)),   # x tile / step
            pl.BlockSpec((D_in, H), lambda i: (0, 0)),            # w1 resident
            pl.BlockSpec((1, H), lambda i: (0, 0)),               # b1 resident
            pl.BlockSpec((H, n_pad), lambda i: (0, 0)),           # w2 resident
            pl.BlockSpec((1, n_pad), lambda i: (0, 0)),           # b2 resident
        ],
        out_specs=pl.BlockSpec((block_rows, n_pad), lambda i: (i, 0)),
        compiler_params=pltpu.CompilerParams(
            dimension_semantics=("parallel",),
            vmem_limit_bytes=vmem_limit),
        cost_estimate=cost,
    )(x, w1b, b1f, w2b, b2f)

    return out[:B, :n_cls]


def _init_linear(key, fan_in, fan_out):
    # Deterministic init mimicking PyTorch nn.Linear default: U(-k, k), k=1/sqrt(fan_in).
    kw, kb = jax.random.split(key)
    bound = 1.0 / jnp.sqrt(jnp.float32(fan_in))
    w = jax.random.uniform(kw, (fan_in, fan_out), jnp.float32, -bound, bound)
    b = jax.random.uniform(kb, (1, fan_out), jnp.float32, -bound, bound)
    return w, b


def _reference(features, w1, b1, w2, b2):
    # Pure-JAX f32 reference (dropout identity in eval mode).
    return jnp.tanh(features @ w1 + b1) @ w2 + b2


if __name__ == "__main__":
    # config.hidden_size = 32  ->  dense input dim = 29 * 4 * 32 = 3712
    hidden_size = 32
    d_in = 29 * 4 * hidden_size
    n_classes = 29

    key = jax.random.PRNGKey(0)
    k_feat, k_dense, k_proj, k_big = jax.random.split(key, 4)

    w1, b1 = _init_linear(k_dense, d_in, hidden_size)      # dense
    w2, b2 = _init_linear(k_proj, hidden_size, n_classes)  # out_proj

    # Small case from the module spec (batch=2): single 8-row tile.
    batch = 2
    features = jax.random.normal(k_feat, (batch, d_in), jnp.float32)
    out = edge_classification_head(features, w1, b1, w2, b2)
    out = jax.block_until_ready(out)
    ref = _reference(features, w1, b1, w2, b2)
    assert out.shape == (batch, n_classes)
    assert jnp.allclose(out, ref, atol=2e-2, rtol=2e-2)

    # Batched case with an explicit tile: 3-step ragged grid (300 rows, tile 128).
    big_batch = 300
    big_features = jax.random.normal(k_big, (big_batch, d_in), jnp.float32)
    big_out = edge_classification_head(big_features, w1, b1, w2, b2,
                                       block_rows=128)
    big_out = jax.block_until_ready(big_out)
    big_ref = _reference(big_features, w1, b1, w2, b2)
    assert big_out.shape == (big_batch, n_classes)
    assert jnp.allclose(big_out, big_ref, atol=2e-2, rtol=2e-2)

    # Same batched case with the default heuristic: even 2-step grid, no row pad.
    auto_out = edge_classification_head(big_features, w1, b1, w2, b2)
    auto_out = jax.block_until_ready(auto_out)
    assert auto_out.shape == (big_batch, n_classes)
    assert jnp.allclose(auto_out, big_ref, atol=2e-2, rtol=2e-2)

    print("KERNEL_OK")
</pallas_src>

<mosaic_0001>
module attributes {stable_mosaic.version = 11 : i64} {
  func.func @edge_head_kernel(%arg0: i32, %arg1: memref<8x3712xf32, #tpu.memory_space<vmem>>, %arg2: memref<3712x32xbf16, #tpu.memory_space<vmem>>, %arg3: memref<1x32xf32, #tpu.memory_space<vmem>>, %arg4: memref<32x128xbf16, #tpu.memory_space<vmem>>, %arg5: memref<1x128xf32, #tpu.memory_space<vmem>>, %arg6: memref<8x128xf32, #tpu.memory_space<vmem>>) attributes {dimension_semantics = [#tpu.dimension_semantics<parallel>], iteration_bounds = array<i64: 1>, scalar_prefetch = 0 : i64, scratch_operands = 0 : i64, tpu.core_type = #tpu.core_type<tc>, window_params = [{transform_indices = @transform_0, window_bounds = array<i64: 8, 3712>}, {pipeline_mode = #tpu.pipeline_mode<synchronous>, transform_indices = @transform_1, window_bounds = array<i64: 3712, 32>}, {pipeline_mode = #tpu.pipeline_mode<synchronous>, transform_indices = @transform_2, window_bounds = array<i64: 1, 32>}, {pipeline_mode = #tpu.pipeline_mode<synchronous>, transform_indices = @transform_3, window_bounds = array<i64: 32, 128>}, {pipeline_mode = #tpu.pipeline_mode<synchronous>, transform_indices = @transform_4, window_bounds = array<i64: 1, 128>}, {transform_indices = @transform_5, window_bounds = array<i64: 8, 128>}]} {
    %c0 = arith.constant 0 : index
    %c0_0 = arith.constant 0 : index
    %0 = vector.load %arg1[%c0, %c0_0] : memref<8x3712xf32, #tpu.memory_space<vmem>>, vector<8x3712xf32>
    %1 = arith.truncf %0 : vector<8x3712xf32> to vector<8x3712xbf16>
    %c0_1 = arith.constant 0 : index
    %c0_2 = arith.constant 0 : index
    %2 = vector.load %arg2[%c0_1, %c0_2] : memref<3712x32xbf16, #tpu.memory_space<vmem>>, vector<3712x32xbf16>
    %cst = arith.constant dense<0.000000e+00> : vector<8x32xf32>
    %3 = tpu.matmul %1, %2, %cst {dimension_numbers = #tpu.dot_dimension_numbers<[1], [0], [0], [1], [0, 0, 1, 1], [], []>} : vector<8x3712xbf16>, vector<3712x32xbf16>, vector<8x32xf32> -> vector<8x32xf32>
    %c0_3 = arith.constant 0 : index
    %c0_4 = arith.constant 0 : index
    %4 = vector.load %arg3[%c0_3, %c0_4] : memref<1x32xf32, #tpu.memory_space<vmem>>, vector<1x32xf32>
    %5 = vector.broadcast %4 : vector<1x32xf32> to vector<8x32xf32>
    %6 = arith.addf %3, %5 : vector<8x32xf32>
    %7 = math.tanh %6 : vector<8x32xf32>
    %8 = arith.truncf %7 : vector<8x32xf32> to vector<8x32xbf16>
    %c0_5 = arith.constant 0 : index
    %c0_6 = arith.constant 0 : index
    %9 = vector.load %arg4[%c0_5, %c0_6] : memref<32x128xbf16, #tpu.memory_space<vmem>>, vector<32x128xbf16>
    %cst_7 = arith.constant dense<0.000000e+00> : vector<8x128xf32>
    %10 = tpu.matmul %8, %9, %cst_7 {dimension_numbers = #tpu.dot_dimension_numbers<[1], [0], [0], [1], [0, 0, 1, 1], [], []>} : vector<8x32xbf16>, vector<32x128xbf16>, vector<8x128xf32> -> vector<8x128xf32>
    %c0_8 = arith.constant 0 : index
    %c0_9 = arith.constant 0 : index
    %11 = vector.load %arg5[%c0_8, %c0_9] : memref<1x128xf32, #tpu.memory_space<vmem>>, vector<1x128xf32>
    %12 = vector.broadcast %11 : vector<1x128xf32> to vector<8x128xf32>
    %13 = arith.addf %10, %12 : vector<8x128xf32>
    %c0_10 = arith.constant 0 : index
    %c0_11 = arith.constant 0 : index
    %14 = vector.load %arg6[%c0_10, %c0_11] : memref<8x128xf32, #tpu.memory_space<vmem>>, vector<8x128xf32>
    tpu.vector_store %arg6[%c0_10, %c0_11], %13 {strides = array<i32>} : memref<8x128xf32, #tpu.memory_space<vmem>>, vector<8x128xf32>,
    return
  }
  func.func @transform_0(%arg0: i32) -> (i32, i32) {
    %c0_i32 = arith.constant 0 : i32
    %c0_i32_0 = arith.constant 0 : i32
    return %arg0, %c0_i32 : i32, i32
  }
  func.func @transform_1(%arg0: i32) -> (i32, i32) {
    %c0_i32 = arith.constant 0 : i32
    %c0_i32_0 = arith.constant 0 : i32
    %c0_i32_1 = arith.constant 0 : i32
    return %c0_i32, %c0_i32_0 : i32, i32
  }
  func.func @transform_2(%arg0: i32) -> (i32, i32) {
    %c0_i32 = arith.constant 0 : i32
    %c0_i32_0 = arith.constant 0 : i32
    %c0_i32_1 = arith.constant 0 : i32
    return %c0_i32, %c0_i32_0 : i32, i32
  }
  func.func @transform_3(%arg0: i32) -> (i32, i32) {
    %c0_i32 = arith.constant 0 : i32
    %c0_i32_0 = arith.constant 0 : i32
    %c0_i32_1 = arith.constant 0 : i32
    return %c0_i32, %c0_i32_0 : i32, i32
  }
  func.func @transform_4(%arg0: i32) -> (i32, i32) {
    %c0_i32 = arith.constant 0 : i32
    %c0_i32_0 = arith.constant 0 : i32
    %c0_i32_1 = arith.constant 0 : i32
    return %c0_i32, %c0_i32_0 : i32, i32
  }
  func.func @transform_5(%arg0: i32) -> (i32, i32) {
    %c0_i32 = arith.constant 0 : i32
    %c0_i32_0 = arith.constant 0 : i32
    return %arg0, %c0_i32 : i32, i32
  }
}

</mosaic_0001>

<llo_original>
// kernel: tpu_custom_call.1
$region0: #{tpu_custom_call.1}
  #allocation0 [shape = 'u32[]', space=smem, size = 0x4, offset = 0x4, fixed_abs, tag = 'smem constant byte address 0x4 - core index']
  #allocation1 [shape = 'u32[144,128]{1,0:T(1,128)}', space=vmem, size = 0x12000, scoped, tag = 'internal scratch']
  %s0 = inlined_call_operand.vmem [shape: f32[8,3712], index: 0, kind: input, shape index: {}]
  %s1 = inlined_call_operand.vmem [shape: bf16[3712,32], index: 1, kind: input, shape index: {}]
  %s2 = inlined_call_operand.vmem [shape: f32[1,32], index: 2, kind: input, shape index: {}]
  %s3 = inlined_call_operand.vmem [shape: bf16[32,128], index: 3, kind: input, shape index: {}]
  %s4 = inlined_call_operand.vmem [shape: f32[1,128], index: 4, kind: input, shape index: {}]
  %s5 = inlined_call_operand.hbm [shape: f32[8,128], index: 5, kind: output, shape index: {}]
  %s6 = sld [smem:[#allocation0]]
  $region30: #{tpu_custom_call.1} parent=0
    _
  %s8 = ssub.s32 1, %s6
  %s9 = scalar_select 0, %s8, %s6
  $region1: #{tpu_custom_call.1} parent=0
    #allocation2 [shape = 'u8[4096]{0}', space=vmem, size = 0x1000, scoped, tag = 'output window, operand 0, single buffered']
    #allocation3 [shape = 's32[1]{0}', space=sflag, size = 0x4, scoped, tag = 'scoped memory for tpu_custom_call.1']
    %10 = vsyncpa [#allocation3], 0
    // Predicated region
    $region2: #{tpu_custom_call.1} parent=1 // pred_check
      _
    $region3: #{tpu_custom_call.1} parent=1 // pred_check_branch
      %12 = sbr.rel (0) target = $region5
    $region4: #{tpu_custom_call.1} parent=1 // pred_region
      _
    $region5: #{tpu_custom_call.1} parent=1 // pred_fallthru
      _
    // Predicated region
    $region6: #{tpu_custom_call.1} parent=1 // pred_check
      _
    $region7: #{tpu_custom_call.1} parent=1 // pred_check_branch
      %14 = sbr.rel (0) target = $region9
    $region8: #{tpu_custom_call.1} parent=1 // pred_region
      _
    $region9: #{tpu_custom_call.1} parent=1 // pred_fallthru
      _
    // Predicated region
    $region10: #{tpu_custom_call.1} parent=1 // pred_check
      _
    $region11: #{tpu_custom_call.1} parent=1 // pred_check_branch
      %16 = sbr.rel (0) target = $region13
    $region12: #{tpu_custom_call.1} parent=1 // pred_region
      _
    $region13: #{tpu_custom_call.1} parent=1 // pred_fallthru
      _
    // Predicated region
    $region14: #{tpu_custom_call.1} parent=1 // pred_check
      _
    $region15: #{tpu_custom_call.1} parent=1 // pred_check_branch
      %18 = sbr.rel (0) target = $region17
    $region16: #{tpu_custom_call.1} parent=1 // pred_region
      _
    $region17: #{tpu_custom_call.1} parent=1 // pred_fallthru
      _
    // Predicated region
    $region18: #{tpu_custom_call.1} parent=1 // pred_check
      _
    $region19: #{tpu_custom_call.1} parent=1 // pred_check_branch
      %20 = sbr.rel (0) target = $region21
    $region20: #{tpu_custom_call.1} parent=1 // pred_region
      _
    $region21: #{tpu_custom_call.1} parent=1 // pred_fallthru
      _
    %v22 = vld [vmem:[%s0] sm:$0xff]
    %v23 = vld [vmem:[%s0 + $0x8] sm:$0xff]
    %v24 = vld [vmem:[%s0 + $0x10] sm:$0xff]
    %v25 = vld [vmem:[%s0 + $0x18] sm:$0xff]
    %v26 = vld [vmem:[%s0 + $0x20] sm:$0xff]
    %v27 = vld [vmem:[%s0 + $0x28] sm:$0xff]
    %v28 = vld [vmem:[%s0 + $0x30] sm:$0xff]
    %v29 = vld [vmem:[%s0 + $0x38] sm:$0xff]
    %v30 = vld [vmem:[%s0 + $0x40] sm:$0xff]
    %v31 = vld [vmem:[%s0 + $0x48] sm:$0xff]
    %v32 = vld [vmem:[%s0 + $0x50] sm:$0xff]
    %v33 = vld [vmem:[%s0 + $0x58] sm:$0xff]
    %v34 = vld [vmem:[%s0 + $0x60] sm:$0xff]
    %v35 = vld [vmem:[%s0 + $0x68] sm:$0xff]
    %v36 = vld [vmem:[%s0 + $0x70] sm:$0xff]
    %v37 = vld [vmem:[%s0 + $0x78] sm:$0xff]
    %v38 = vld [vmem:[%s0 + $0x80] sm:$0xff]
    %v39 = vld [vmem:[%s0 + $0x88] sm:$0xff]
    %v40 = vld [vmem:[%s0 + $0x90] sm:$0xff]
    %v41 = vld [vmem:[%s0 + $0x98] sm:$0xff]
    %v42 = vld [vmem:[%s0 + $0xa0] sm:$0xff]
    %v43 = vld [vmem:[%s0 + $0xa8] sm:$0xff]
    %v44 = vld [vmem:[%s0 + $0xb0] sm:$0xff]
    %v45 = vld [vmem:[%s0 + $0xb8] sm:$0xff]
    %v46 = vld [vmem:[%s0 + $0xc0] sm:$0xff]
    %v47 = vld [vmem:[%s0 + $0xc8] sm:$0xff]
    %v48 = vld [vmem:[%s0 + $0xd0] sm:$0xff]
    %v49 = vld [vmem:[%s0 + $0xd8] sm:$0xff]
    %v50 = vld [vmem:[%s0 + $0xe0] sm:$0xff]
    %v51 = vpack.c.bf16 %v22, %v22
    %v52 = vpack.c.bf16 %v23, %v23
    %v53 = vpack.c.bf16 %v24, %v24
    %v54 = vpack.c.bf16 %v25, %v25
    %v55 = vpack.c.bf16 %v26, %v26
    %v56 = vpack.c.bf16 %v27, %v27
    %v57 = vpack.c.bf16 %v28, %v28
    %v58 = vpack.c.bf16 %v29, %v29
    %v59 = vpack.c.bf16 %v30, %v30
    %v60 = vpack.c.bf16 %v31, %v31
    %v61 = vpack.c.bf16 %v32, %v32
    %v62 = vpack.c.bf16 %v33, %v33
    %v63 = vpack.c.bf16 %v34, %v34
    %v64 = vpack.c.bf16 %v35, %v35
    %v65 = vpack.c.bf16 %v36, %v36
    %v66 = vpack.c.bf16 %v37, %v37
    %v67 = vpack.c.bf16 %v38, %v38
    %v68 = vpack.c.bf16 %v39, %v39
    %v69 = vpack.c.bf16 %v40, %v40
    %v70 = vpack.c.bf16 %v41, %v41
    %v71 = vpack.c.bf16 %v42, %v42
    %v72 = vpack.c.bf16 %v43, %v43
    %v73 = vpack.c.bf16 %v44, %v44
    %v74 = vpack.c.bf16 %v45, %v45
    %v75 = vpack.c.bf16 %v46, %v46
    %v76 = vpack.c.bf16 %v47, %v47
    %v77 = vpack.c.bf16 %v48, %v48
    %v78 = vpack.c.bf16 %v49, %v49
    %v79 = vpack.c.bf16 %v50, %v50
    %v80 = vld [vmem:[%s1] sm:$0xf]
    %v81 = vld [vmem:[%s1 + $0x4] sm:$0xf]
    %v82 = vld [vmem:[%s1 + $0x8] sm:$0xf]
    %v83 = vld [vmem:[%s1 + $0xc] sm:$0xf]
    %v84 = vld [vmem:[%s1 + $0x10] sm:$0xf]
    %v85 = vld [vmem:[%s1 + $0x14] sm:$0xf]
    %v86 = vld [vmem:[%s1 + $0x18] sm:$0xf]
    %v87 = vld [vmem:[%s1 + $0x1c] sm:$0xf]
    %v88 = vld [vmem:[%s1 + $0x20] sm:$0xf]
    %v89 = vld [vmem:[%s1 + $0x24] sm:$0xf]
    %v90 = vld [vmem:[%s1 + $0x28] sm:$0xf]
    %v91 = vld [vmem:[%s1 + $0x2c] sm:$0xf]
    %v92 = vld [vmem:[%s1 + $0x30] sm:$0xf]
    %v93 = vld [vmem:[%s1 + $0x34] sm:$0xf]
    %v94 = vld [vmem:[%s1 + $0x38] sm:$0xf]
    %v95 = vld [vmem:[%s1 + $0x3c] sm:$0xf]
    %v96 = vld [vmem:[%s1 + $0x40] sm:$0xf]
    %v97 = vld [vmem:[%s1 + $0x44] sm:$0xf]
    %v98 = vld [vmem:[%s1 + $0x48] sm:$0xf]
    %v99 = vld [vmem:[%s1 + $0x4c] sm:$0xf]
    %v100 = vld [vmem:[%s1 + $0x50] sm:$0xf]
    %v101 = vld [vmem:[%s1 + $0x54] sm:$0xf]
    %v102 = vld [vmem:[%s1 + $0x58] sm:$0xf]
    %v103 = vld [vmem:[%s1 + $0x5c] sm:$0xf]
    %v104 = vld [vmem:[%s1 + $0x60] sm:$0xf]
    %v105 = vld [vmem:[%s1 + $0x64] sm:$0xf]
    %v106 = vld [vmem:[%s1 + $0x68] sm:$0xf]
    %v107 = vld [vmem:[%s1 + $0x6c] sm:$0xf]
    %v108 = vld [vmem:[%s1 + $0x70] sm:$0xf]
    %v109 = vld [vmem:[%s1 + $0x74] sm:$0xf]
    %v110 = vld [vmem:[%s1 + $0x78] sm:$0xf]
    %v111 = vld [vmem:[%s1 + $0x7c] sm:$0xf]
    %v112 = vld [vmem:[%s1 + $0x80] sm:$0xf]
    %v113 = vld [vmem:[%s1 + $0x84] sm:$0xf]
    %v114 = vld [vmem:[%s1 + $0x88] sm:$0xf]
    %v115 = vld [vmem:[%s1 + $0x8c] sm:$0xf]
    %v116 = vld [vmem:[%s1 + $0x90] sm:$0xf]
    %v117 = vld [vmem:[%s1 + $0x94] sm:$0xf]
    %v118 = vld [vmem:[%s1 + $0x98] sm:$0xf]
    %v119 = vld [vmem:[%s1 + $0x9c] sm:$0xf]
    %v120 = vld [vmem:[%s1 + $0xa0] sm:$0xf]
    %v121 = vld [vmem:[%s1 + $0xa4] sm:$0xf]
    %v122 = vld [vmem:[%s1 + $0xa8] sm:$0xf]
    %v123 = vld [vmem:[%s1 + $0xac] sm:$0xf]
    %v124 = vld [vmem:[%s1 + $0xb0] sm:$0xf]
    %v125 = vld [vmem:[%s1 + $0xb4] sm:$0xf]
    %v126 = vld [vmem:[%s1 + $0xb8] sm:$0xf]
    %v127 = vld [vmem:[%s1 + $0xbc] sm:$0xf]
    %v128 = vld [vmem:[%s1 + $0xc0] sm:$0xf]
    %v129 = vld [vmem:[%s1 + $0xc4] sm:$0xf]
    %v130 = vld [vmem:[%s1 + $0xc8] sm:$0xf]
    %v131 = vld [vmem:[%s1 + $0xcc] sm:$0xf]
    %v132 = vld [vmem:[%s1 + $0xd0] sm:$0xf]
    %v133 = vld [vmem:[%s1 + $0xd4] sm:$0xf]
    %v134 = vld [vmem:[%s1 + $0xd8] sm:$0xf]
    %v135 = vld [vmem:[%s1 + $0xdc] sm:$0xf]
    %v136 = vld [vmem:[%s1 + $0xe0] sm:$0xf]
    %v137 = vld [vmem:[%s1 + $0xe4] sm:$0xf]
    %v138 = vld [vmem:[%s1 + $0xe8] sm:$0xf]
    %v139 = vld [vmem:[%s1 + $0xec] sm:$0xf]
    %v140 = vld [vmem:[%s1 + $0xf0] sm:$0xf]
    %v141 = vld [vmem:[%s1 + $0xf4] sm:$0xf]
    %v142 = vld [vmem:[%s1 + $0xf8] sm:$0xf]
    %v143 = vld [vmem:[%s1 + $0xfc] sm:$0xf]
    %v144 = vld [vmem:[%s1 + $0x100] sm:$0xf]
    %v145 = vld [vmem:[%s1 + $0x104] sm:$0xf]
    %v146 = vld [vmem:[%s1 + $0x108] sm:$0xf]
    %v147 = vld [vmem:[%s1 + $0x10c] sm:$0xf]
    %v148 = vld [vmem:[%s1 + $0x110] sm:$0xf]
    %v149 = vld [vmem:[%s1 + $0x114] sm:$0xf]
    %v150 = vld [vmem:[%s1 + $0x118] sm:$0xf]
    %v151 = vld [vmem:[%s1 + $0x11c] sm:$0xf]
    %v152 = vld [vmem:[%s1 + $0x120] sm:$0xf]
    %v153 = vld [vmem:[%s1 + $0x124] sm:$0xf]
    %v154 = vld [vmem:[%s1 + $0x128] sm:$0xf]
    %v155 = vld [vmem:[%s1 + $0x12c] sm:$0xf]
    %v156 = vld [vmem:[%s1 + $0x130] sm:$0xf]
    %v157 = vld [vmem:[%s1 + $0x134] sm:$0xf]
    %v158 = vld [vmem:[%s1 + $0x138] sm:$0xf]
    %v159 = vld [vmem:[%s1 + $0x13c] sm:$0xf]
    %v160 = vld [vmem:[%s1 + $0x140] sm:$0xf]
    %v161 = vld [vmem:[%s1 + $0x144] sm:$0xf]
    %v162 = vld [vmem:[%s1 + $0x148] sm:$0xf]
    %v163 = vld [vmem:[%s1 + $0x14c] sm:$0xf]
    %v164 = vld [vmem:[%s1 + $0x150] sm:$0xf]
    %v165 = vld [vmem:[%s1 + $0x154] sm:$0xf]
    %v166 = vld [vmem:[%s1 + $0x158] sm:$0xf]
    %v167 = vld [vmem:[%s1 + $0x15c] sm:$0xf]
    %v168 = vld [vmem:[%s1 + $0x160] sm:$0xf]
    %v169 = vld [vmem:[%s1 + $0x164] sm:$0xf]
    %v170 = vld [vmem:[%s1 + $0x168] sm:$0xf]
    %v171 = vld [vmem:[%s1 + $0x16c] sm:$0xf]
    %v172 = vld [vmem:[%s1 + $0x170] sm:$0xf]
    %v173 = vld [vmem:[%s1 + $0x174] sm:$0xf]
    %v174 = vld [vmem:[%s1 + $0x178] sm:$0xf]
    %v175 = vld [vmem:[%s1 + $0x17c] sm:$0xf]
    %v176 = vld [vmem:[%s1 + $0x180] sm:$0xf]
    %v177 = vld [vmem:[%s1 + $0x184] sm:$0xf]
    %v178 = vld [vmem:[%s1 + $0x188] sm:$0xf]
    %v179 = vld [vmem:[%s1 + $0x18c] sm:$0xf]
    %v180 = vld [vmem:[%s1 + $0x190] sm:$0xf]
    %v181 = vld [vmem:[%s1 + $0x194] sm:$0xf]
    %v182 = vld [vmem:[%s1 + $0x198] sm:$0xf]
    %v183 = vld [vmem:[%s1 + $0x19c] sm:$0xf]
    %v184 = vld [vmem:[%s1 + $0x1a0] sm:$0xf]
    %v185 = vld [vmem:[%s1 + $0x1a4] sm:$0xf]
    %v186 = vld [vmem:[%s1 + $0x1a8] sm:$0xf]
    %v187 = vld [vmem:[%s1 + $0x1ac] sm:$0xf]
    %v188 = vld [vmem:[%s1 + $0x1b0] sm:$0xf]
    %v189 = vld [vmem:[%s1 + $0x1b4] sm:$0xf]
    %v190 = vld [vmem:[%s1 + $0x1b8] sm:$0xf]
    %v191 = vld [vmem:[%s1 + $0x1bc] sm:$0xf]
    %v192 = vld [vmem:[%s1 + $0x1c0] sm:$0xf]
    %v193 = vld [vmem:[%s1 + $0x1c4] sm:$0xf]
    %v194 = vld [vmem:[%s1 + $0x1c8] sm:$0xf]
    %v195 = vld [vmem:[%s1 + $0x1cc] sm:$0xf]
    %v196 = vld [vmem:[%s1 + $0x1d0] sm:$0xf]
    %v197 = vld [vmem:[%s1 + $0x1d4] sm:$0xf]
    %v198 = vld [vmem:[%s1 + $0x1d8] sm:$0xf]
    %v199 = vld [vmem:[%s1 + $0x1dc] sm:$0xf]
    %v200 = vld [vmem:[%s1 + $0x1e0] sm:$0xf]
    %v201 = vld [vmem:[%s1 + $0x1e4] sm:$0xf]
    %v202 = vld [vmem:[%s1 + $0x1e8] sm:$0xf]
    %v203 = vld [vmem:[%s1 + $0x1ec] sm:$0xf]
    %v204 = vld [vmem:[%s1 + $0x1f0] sm:$0xf]
    %v205 = vld [vmem:[%s1 + $0x1f4] sm:$0xf]
    %v206 = vld [vmem:[%s1 + $0x1f8] sm:$0xf]
    %v207 = vld [vmem:[%s1 + $0x1fc] sm:$0xf]
    %v208 = vld [vmem:[%s1 + $0x200] sm:$0xf]
    %v209 = vld [vmem:[%s1 + $0x204] sm:$0xf]
    %v210 = vld [vmem:[%s1 + $0x208] sm:$0xf]
    %v211 = vld [vmem:[%s1 + $0x20c] sm:$0xf]
    %v212 = vld [vmem:[%s1 + $0x210] sm:$0xf]
    %v213 = vld [vmem:[%s1 + $0x214] sm:$0xf]
    %v214 = vld [vmem:[%s1 + $0x218] sm:$0xf]
    %v215 = vld [vmem:[%s1 + $0x21c] sm:$0xf]
    %v216 = vld [vmem:[%s1 + $0x220] sm:$0xf]
    %v217 = vld [vmem:[%s1 + $0x224] sm:$0xf]
    %v218 = vld [vmem:[%s1 + $0x228] sm:$0xf]
    %v219 = vld [vmem:[%s1 + $0x22c] sm:$0xf]
    %v220 = vld [vmem:[%s1 + $0x230] sm:$0xf]
    %v221 = vld [vmem:[%s1 + $0x234] sm:$0xf]
    %v222 = vld [vmem:[%s1 + $0x238] sm:$0xf]
    %v223 = vld [vmem:[%s1 + $0x23c] sm:$0xf]
    %v224 = vld [vmem:[%s1 + $0x240] sm:$0xf]
    %v225 = vld [vmem:[%s1 + $0x244] sm:$0xf]
    %v226 = vld [vmem:[%s1 + $0x248] sm:$0xf]
    %v227 = vld [vmem:[%s1 + $0x24c] sm:$0xf]
    %v228 = vld [vmem:[%s1 + $0x250] sm:$0xf]
    %v229 = vld [vmem:[%s1 + $0x254] sm:$0xf]
    %v230 = vld [vmem:[%s1 + $0x258] sm:$0xf]
    %v231 = vld [vmem:[%s1 + $0x25c] sm:$0xf]
    %v232 = vld [vmem:[%s1 + $0x260] sm:$0xf]
    %v233 = vld [vmem:[%s1 + $0x264] sm:$0xf]
    %v234 = vld [vmem:[%s1 + $0x268] sm:$0xf]
    %v235 = vld [vmem:[%s1 + $0x26c] sm:$0xf]
    %v236 = vld [vmem:[%s1 + $0x270] sm:$0xf]
    %v237 = vld [vmem:[%s1 + $0x274] sm:$0xf]
    %v238 = vld [vmem:[%s1 + $0x278] sm:$0xf]
    %v239 = vld [vmem:[%s1 + $0x27c] sm:$0xf]
    %v240 = vld [vmem:[%s1 + $0x280] sm:$0xf]
    %v241 = vld [vmem:[%s1 + $0x284] sm:$0xf]
    %v242 = vld [vmem:[%s1 + $0x288] sm:$0xf]
    %v243 = vld [vmem:[%s1 + $0x28c] sm:$0xf]
    %v244 = vld [vmem:[%s1 + $0x290] sm:$0xf]
    %v245 = vld [vmem:[%s1 + $0x294] sm:$0xf]
    %v246 = vld [vmem:[%s1 + $0x298] sm:$0xf]
    %v247 = vld [vmem:[%s1 + $0x29c] sm:$0xf]
    %v248 = vld [vmem:[%s1 + $0x2a0] sm:$0xf]
    %v249 = vld [vmem:[%s1 + $0x2a4] sm:$0xf]
    %v250 = vld [vmem:[%s1 + $0x2a8] sm:$0xf]
    %v251 = vld [vmem:[%s1 + $0x2ac] sm:$0xf]
    %v252 = vld [vmem:[%s1 + $0x2b0] sm:$0xf]
    %v253 = vld [vmem:[%s1 + $0x2b4] sm:$0xf]
    %v254 = vld [vmem:[%s1 + $0x2b8] sm:$0xf]
    %v255 = vld [vmem:[%s1 + $0x2bc] sm:$0xf]
    %v256 = vld [vmem:[%s1 + $0x2c0] sm:$0xf]
    %v257 = vld [vmem:[%s1 + $0x2c4] sm:$0xf]
    %v258 = vld [vmem:[%s1 + $0x2c8] sm:$0xf]
    %v259 = vld [vmem:[%s1 + $0x2cc] sm:$0xf]
    %v260 = vld [vmem:[%s1 + $0x2d0] sm:$0xf]
    %v261 = vld [vmem:[%s1 + $0x2d4] sm:$0xf]
    %v262 = vld [vmem:[%s1 + $0x2d8] sm:$0xf]
    %v263 = vld [vmem:[%s1 + $0x2dc] sm:$0xf]
    %v264 = vld [vmem:[%s1 + $0x2e0] sm:$0xf]
    %v265 = vld [vmem:[%s1 + $0x2e4] sm:$0xf]
    %v266 = vld [vmem:[%s1 + $0x2e8] sm:$0xf]
    %v267 = vld [vmem:[%s1 + $0x2ec] sm:$0xf]
    %v268 = vld [vmem:[%s1 + $0x2f0] sm:$0xf]
    %v269 = vld [vmem:[%s1 + $0x2f4] sm:$0xf]
    %v270 = vld [vmem:[%s1 + $0x2f8] sm:$0xf]
    %v271 = vld [vmem:[%s1 + $0x2fc] sm:$0xf]
    %v272 = vld [vmem:[%s1 + $0x300] sm:$0xf]
    %v273 = vld [vmem:[%s1 + $0x304] sm:$0xf]
    %v274 = vld [vmem:[%s1 + $0x308] sm:$0xf]
    %v275 = vld [vmem:[%s1 + $0x30c] sm:$0xf]
    %v276 = vld [vmem:[%s1 + $0x310] sm:$0xf]
    %v277 = vld [vmem:[%s1 + $0x314] sm:$0xf]
    %v278 = vld [vmem:[%s1 + $0x318] sm:$0xf]
    %v279 = vld [vmem:[%s1 + $0x31c] sm:$0xf]
    %v280 = vld [vmem:[%s1 + $0x320] sm:$0xf]
    %v281 = vld [vmem:[%s1 + $0x324] sm:$0xf]
    %v282 = vld [vmem:[%s1 + $0x328] sm:$0xf]
    %v283 = vld [vmem:[%s1 + $0x32c] sm:$0xf]
    %v284 = vld [vmem:[%s1 + $0x330] sm:$0xf]
    %v285 = vld [vmem:[%s1 + $0x334] sm:$0xf]
    %v286 = vld [vmem:[%s1 + $0x338] sm:$0xf]
    %v287 = vld [vmem:[%s1 + $0x33c] sm:$0xf]
    %v288 = vld [vmem:[%s1 + $0x340] sm:$0xf]
    %v289 = vld [vmem:[%s1 + $0x344] sm:$0xf]
    %v290 = vld [vmem:[%s1 + $0x348] sm:$0xf]
    %v291 = vld [vmem:[%s1 + $0x34c] sm:$0xf]
    %v292 = vld [vmem:[%s1 + $0x350] sm:$0xf]
    %v293 = vld [vmem:[%s1 + $0x354] sm:$0xf]
    %v294 = vld [vmem:[%s1 + $0x358] sm:$0xf]
    %v295 = vld [vmem:[%s1 + $0x35c] sm:$0xf]
    %v296 = vld [vmem:[%s1 + $0x360] sm:$0xf]
    %v297 = vld [vmem:[%s1 + $0x364] sm:$0xf]
    %v298 = vld [vmem:[%s1 + $0x368] sm:$0xf]
    %v299 = vld [vmem:[%s1 + $0x36c] sm:$0xf]
    %v300 = vld [vmem:[%s1 + $0x370] sm:$0xf]
    %v301 = vld [vmem:[%s1 + $0x374] sm:$0xf]
    %v302 = vld [vmem:[%s1 + $0x378] sm:$0xf]
    %v303 = vld [vmem:[%s1 + $0x37c] sm:$0xf]
    %v304 = vld [vmem:[%s1 + $0x380] sm:$0xf]
    %v305 = vld [vmem:[%s1 + $0x384] sm:$0xf]
    %v306 = vld [vmem:[%s1 + $0x388] sm:$0xf]
    %v307 = vld [vmem:[%s1 + $0x38c] sm:$0xf]
    %v308 = vld [vmem:[%s1 + $0x390] sm:$0xf]
    %v309 = vld [vmem:[%s1 + $0x394] sm:$0xf]
    %v310 = vld [vmem:[%s1 + $0x398] sm:$0xf]
    %v311 = vld [vmem:[%s1 + $0x39c] sm:$0xf]
    %v312 = vld [vmem:[%s1 + $0x3a0] sm:$0xf]
    %v313 = vld [vmem:[%s1 + $0x3a4] sm:$0xf]
    %v314 = vld [vmem:[%s1 + $0x3a8] sm:$0xf]
    %v315 = vld [vmem:[%s1 + $0x3ac] sm:$0xf]
    %v316 = vld [vmem:[%s1 + $0x3b0] sm:$0xf]
    %v317 = vld [vmem:[%s1 + $0x3b4] sm:$0xf]
    %v318 = vld [vmem:[%s1 + $0x3b8] sm:$0xf]
    %v319 = vld [vmem:[%s1 + $0x3bc] sm:$0xf]
    %v320 = vld [vmem:[%s1 + $0x3c0] sm:$0xf]
    %v321 = vld [vmem:[%s1 + $0x3c4] sm:$0xf]
    %v322 = vld [vmem:[%s1 + $0x3c8] sm:$0xf]
    %v323 = vld [vmem:[%s1 + $0x3cc] sm:$0xf]
    %v324 = vld [vmem:[%s1 + $0x3d0] sm:$0xf]
    %v325 = vld [vmem:[%s1 + $0x3d4] sm:$0xf]
    %v326 = vld [vmem:[%s1 + $0x3d8] sm:$0xf]
    %v327 = vld [vmem:[%s1 + $0x3dc] sm:$0xf]
    %v328 = vld [vmem:[%s1 + $0x3e0] sm:$0xf]
    %v329 = vld [vmem:[%s1 + $0x3e4] sm:$0xf]
    %v330 = vld [vmem:[%s1 + $0x3e8] sm:$0xf]
    %v331 = vld [vmem:[%s1 + $0x3ec] sm:$0xf]
    %v332 = vld [vmem:[%s1 + $0x3f0] sm:$0xf]
    %v333 = vld [vmem:[%s1 + $0x3f4] sm:$0xf]
    %v334 = vld [vmem:[%s1 + $0x3f8] sm:$0xf]
    %v335 = vld [vmem:[%s1 + $0x3fc] sm:$0xf]
    %v336 = vld [vmem:[%s1 + $0x400] sm:$0xf]
    %v337 = vld [vmem:[%s1 + $0x404] sm:$0xf]
    %v338 = vld [vmem:[%s1 + $0x408] sm:$0xf]
    %v339 = vld [vmem:[%s1 + $0x40c] sm:$0xf]
    %v340 = vld [vmem:[%s1 + $0x410] sm:$0xf]
    %v341 = vld [vmem:[%s1 + $0x414] sm:$0xf]
    %v342 = vld [vmem:[%s1 + $0x418] sm:$0xf]
    %v343 = vld [vmem:[%s1 + $0x41c] sm:$0xf]
    %v344 = vld [vmem:[%s1 + $0x420] sm:$0xf]
    %v345 = vld [vmem:[%s1 + $0x424] sm:$0xf]
    %v346 = vld [vmem:[%s1 + $0x428] sm:$0xf]
    %v347 = vld [vmem:[%s1 + $0x42c] sm:$0xf]
    %v348 = vld [vmem:[%s1 + $0x430] sm:$0xf]
    %v349 = vld [vmem:[%s1 + $0x434] sm:$0xf]
    %v350 = vld [vmem:[%s1 + $0x438] sm:$0xf]
    %v351 = vld [vmem:[%s1 + $0x43c] sm:$0xf]
    %v352 = vld [vmem:[%s1 + $0x440] sm:$0xf]
    %v353 = vld [vmem:[%s1 + $0x444] sm:$0xf]
    %v354 = vld [vmem:[%s1 + $0x448] sm:$0xf]
    %v355 = vld [vmem:[%s1 + $0x44c] sm:$0xf]
    %v356 = vld [vmem:[%s1 + $0x450] sm:$0xf]
    %v357 = vld [vmem:[%s1 + $0x454] sm:$0xf]
    %v358 = vld [vmem:[%s1 + $0x458] sm:$0xf]
    %v359 = vld [vmem:[%s1 + $0x45c] sm:$0xf]
    %v360 = vld [vmem:[%s1 + $0x460] sm:$0xf]
    %v361 = vld [vmem:[%s1 + $0x464] sm:$0xf]
    %v362 = vld [vmem:[%s1 + $0x468] sm:$0xf]
    %v363 = vld [vmem:[%s1 + $0x46c] sm:$0xf]
    %v364 = vld [vmem:[%s1 + $0x470] sm:$0xf]
    %v365 = vld [vmem:[%s1 + $0x474] sm:$0xf]
    %v366 = vld [vmem:[%s1 + $0x478] sm:$0xf]
    %v367 = vld [vmem:[%s1 + $0x47c] sm:$0xf]
    %v368 = vld [vmem:[%s1 + $0x480] sm:$0xf]
    %v369 = vld [vmem:[%s1 + $0x484] sm:$0xf]
    %v370 = vld [vmem:[%s1 + $0x488] sm:$0xf]
    %v371 = vld [vmem:[%s1 + $0x48c] sm:$0xf]
    %v372 = vld [vmem:[%s1 + $0x490] sm:$0xf]
    %v373 = vld [vmem:[%s1 + $0x494] sm:$0xf]
    %v374 = vld [vmem:[%s1 + $0x498] sm:$0xf]
    %v375 = vld [vmem:[%s1 + $0x49c] sm:$0xf]
    %v376 = vld [vmem:[%s1 + $0x4a0] sm:$0xf]
    %v377 = vld [vmem:[%s1 + $0x4a4] sm:$0xf]
    %v378 = vld [vmem:[%s1 + $0x4a8] sm:$0xf]
    %v379 = vld [vmem:[%s1 + $0x4ac] sm:$0xf]
    %v380 = vld [vmem:[%s1 + $0x4b0] sm:$0xf]
    %v381 = vld [vmem:[%s1 + $0x4b4] sm:$0xf]
    %v382 = vld [vmem:[%s1 + $0x4b8] sm:$0xf]
    %v383 = vld [vmem:[%s1 + $0x4bc] sm:$0xf]
    %v384 = vld [vmem:[%s1 + $0x4c0] sm:$0xf]
    %v385 = vld [vmem:[%s1 + $0x4c4] sm:$0xf]
    %v386 = vld [vmem:[%s1 + $0x4c8] sm:$0xf]
    %v387 = vld [vmem:[%s1 + $0x4cc] sm:$0xf]
    %v388 = vld [vmem:[%s1 + $0x4d0] sm:$0xf]
    %v389 = vld [vmem:[%s1 + $0x4d4] sm:$0xf]
    %v390 = vld [vmem:[%s1 + $0x4d8] sm:$0xf]
    %v391 = vld [vmem:[%s1 + $0x4dc] sm:$0xf]
    %v392 = vld [vmem:[%s1 + $0x4e0] sm:$0xf]
    %v393 = vld [vmem:[%s1 + $0x4e4] sm:$0xf]
    %v394 = vld [vmem:[%s1 + $0x4e8] sm:$0xf]
    %v395 = vld [vmem:[%s1 + $0x4ec] sm:$0xf]
    %v396 = vld [vmem:[%s1 + $0x4f0] sm:$0xf]
    %v397 = vld [vmem:[%s1 + $0x4f4] sm:$0xf]
    %v398 = vld [vmem:[%s1 + $0x4f8] sm:$0xf]
    %v399 = vld [vmem:[%s1 + $0x4fc] sm:$0xf]
    %v400 = vld [vmem:[%s1 + $0x500] sm:$0xf]
    %v401 = vld [vmem:[%s1 + $0x504] sm:$0xf]
    %v402 = vld [vmem:[%s1 + $0x508] sm:$0xf]
    %v403 = vld [vmem:[%s1 + $0x50c] sm:$0xf]
    %v404 = vld [vmem:[%s1 + $0x510] sm:$0xf]
    %v405 = vld [vmem:[%s1 + $0x514] sm:$0xf]
    %v406 = vld [vmem:[%s1 + $0x518] sm:$0xf]
    %v407 = vld [vmem:[%s1 + $0x51c] sm:$0xf]
    %v408 = vld [vmem:[%s1 + $0x520] sm:$0xf]
    %v409 = vld [vmem:[%s1 + $0x524] sm:$0xf]
    %v410 = vld [vmem:[%s1 + $0x528] sm:$0xf]
    %v411 = vld [vmem:[%s1 + $0x52c] sm:$0xf]
    %v412 = vld [vmem:[%s1 + $0x530] sm:$0xf]
    %v413 = vld [vmem:[%s1 + $0x534] sm:$0xf]
    %v414 = vld [vmem:[%s1 + $0x538] sm:$0xf]
    %v415 = vld [vmem:[%s1 + $0x53c] sm:$0xf]
    %v416 = vld [vmem:[%s1 + $0x540] sm:$0xf]
    %v417 = vld [vmem:[%s1 + $0x544] sm:$0xf]
    %v418 = vld [vmem:[%s1 + $0x548] sm:$0xf]
    %v419 = vld [vmem:[%s1 + $0x54c] sm:$0xf]
    %v420 = vld [vmem:[%s1 + $0x550] sm:$0xf]
    %v421 = vld [vmem:[%s1 + $0x554] sm:$0xf]
    %v422 = vld [vmem:[%s1 + $0x558] sm:$0xf]
    %v423 = vld [vmem:[%s1 + $0x55c] sm:$0xf]
    %v424 = vld [vmem:[%s1 + $0x560] sm:$0xf]
    %v425 = vld [vmem:[%s1 + $0x564] sm:$0xf]
    %v426 = vld [vmem:[%s1 + $0x568] sm:$0xf]
    %v427 = vld [vmem:[%s1 + $0x56c] sm:$0xf]
    %v428 = vld [vmem:[%s1 + $0x570] sm:$0xf]
    %v429 = vld [vmem:[%s1 + $0x574] sm:$0xf]
    %v430 = vld [vmem:[%s1 + $0x578] sm:$0xf]
    %v431 = vld [vmem:[%s1 + $0x57c] sm:$0xf]
    %v432 = vld [vmem:[%s1 + $0x580] sm:$0xf]
    %v433 = vld [vmem:[%s1 + $0x584] sm:$0xf]
    %v434 = vld [vmem:[%s1 + $0x588] sm:$0xf]
    %v435 = vld [vmem:[%s1 + $0x58c] sm:$0xf]
    %v436 = vld [vmem:[%s1 + $0x590] sm:$0xf]
    %v437 = vld [vmem:[%s1 + $0x594] sm:$0xf]
    %v438 = vld [vmem:[%s1 + $0x598] sm:$0xf]
    %v439 = vld [vmem:[%s1 + $0x59c] sm:$0xf]
    %v440 = vld [vmem:[%s1 + $0x5a0] sm:$0xf]
    %v441 = vld [vmem:[%s1 + $0x5a4] sm:$0xf]
    %v442 = vld [vmem:[%s1 + $0x5a8] sm:$0xf]
    %v443 = vld [vmem:[%s1 + $0x5ac] sm:$0xf]
    %v444 = vld [vmem:[%s1 + $0x5b0] sm:$0xf]
    %v445 = vld [vmem:[%s1 + $0x5b4] sm:$0xf]
    %v446 = vld [vmem:[%s1 + $0x5b8] sm:$0xf]
    %v447 = vld [vmem:[%s1 + $0x5bc] sm:$0xf]
    %v448 = vld [vmem:[%s1 + $0x5c0] sm:$0xf]
    %v449 = vld [vmem:[%s1 + $0x5c4] sm:$0xf]
    %v450 = vld [vmem:[%s1 + $0x5c8] sm:$0xf]
    %v451 = vld [vmem:[%s1 + $0x5cc] sm:$0xf]
    %v452 = vld [vmem:[%s1 + $0x5d0] sm:$0xf]
    %v453 = vld [vmem:[%s1 + $0x5d4] sm:$0xf]
    %v454 = vld [vmem:[%s1 + $0x5d8] sm:$0xf]
    %v455 = vld [vmem:[%s1 + $0x5dc] sm:$0xf]
    %v456 = vld [vmem:[%s1 + $0x5e0] sm:$0xf]
    %v457 = vld [vmem:[%s1 + $0x5e4] sm:$0xf]
    %v458 = vld [vmem:[%s1 + $0x5e8] sm:$0xf]
    %v459 = vld [vmem:[%s1 + $0x5ec] sm:$0xf]
    %v460 = vld [vmem:[%s1 + $0x5f0] sm:$0xf]
    %v461 = vld [vmem:[%s1 + $0x5f4] sm:$0xf]
    %v462 = vld [vmem:[%s1 + $0x5f8] sm:$0xf]
    %v463 = vld [vmem:[%s1 + $0x5fc] sm:$0xf]
    %v464 = vld [vmem:[%s1 + $0x600] sm:$0xf]
    %v465 = vld [vmem:[%s1 + $0x604] sm:$0xf]
    %v466 = vld [vmem:[%s1 + $0x608] sm:$0xf]
    %v467 = vld [vmem:[%s1 + $0x60c] sm:$0xf]
    %v468 = vld [vmem:[%s1 + $0x610] sm:$0xf]
    %v469 = vld [vmem:[%s1 + $0x614] sm:$0xf]
    %v470 = vld [vmem:[%s1 + $0x618] sm:$0xf]
    %v471 = vld [vmem:[%s1 + $0x61c] sm:$0xf]
    %v472 = vld [vmem:[%s1 + $0x620] sm:$0xf]
    %v473 = vld [vmem:[%s1 + $0x624] sm:$0xf]
    %v474 = vld [vmem:[%s1 + $0x628] sm:$0xf]
    %v475 = vld [vmem:[%s1 + $0x62c] sm:$0xf]
    %v476 = vld [vmem:[%s1 + $0x630] sm:$0xf]
    %v477 = vld [vmem:[%s1 + $0x634] sm:$0xf]
    %v478 = vld [vmem:[%s1 + $0x638] sm:$0xf]
    %v479 = vld [vmem:[%s1 + $0x63c] sm:$0xf]
    %v480 = vld [vmem:[%s1 + $0x640] sm:$0xf]
    %v481 = vld [vmem:[%s1 + $0x644] sm:$0xf]
    %v482 = vld [vmem:[%s1 + $0x648] sm:$0xf]
    %v483 = vld [vmem:[%s1 + $0x64c] sm:$0xf]
    %v484 = vld [vmem:[%s1 + $0x650] sm:$0xf]
    %v485 = vld [vmem:[%s1 + $0x654] sm:$0xf]
    %v486 = vld [vmem:[%s1 + $0x658] sm:$0xf]
    %v487 = vld [vmem:[%s1 + $0x65c] sm:$0xf]
    %v488 = vld [vmem:[%s1 + $0x660] sm:$0xf]
    %v489 = vld [vmem:[%s1 + $0x664] sm:$0xf]
    %v490 = vld [vmem:[%s1 + $0x668] sm:$0xf]
    %v491 = vld [vmem:[%s1 + $0x66c] sm:$0xf]
    %v492 = vld [vmem:[%s1 + $0x670] sm:$0xf]
    %v493 = vld [vmem:[%s1 + $0x674] sm:$0xf]
    %v494 = vld [vmem:[%s1 + $0x678] sm:$0xf]
    %v495 = vld [vmem:[%s1 + $0x67c] sm:$0xf]
    %v496 = vld [vmem:[%s1 + $0x680] sm:$0xf]
    %v497 = vld [vmem:[%s1 + $0x684] sm:$0xf]
    %v498 = vld [vmem:[%s1 + $0x688] sm:$0xf]
    %v499 = vld [vmem:[%s1 + $0x68c] sm:$0xf]
    %v500 = vld [vmem:[%s1 + $0x690] sm:$0xf]
    %v501 = vld [vmem:[%s1 + $0x694] sm:$0xf]
    %v502 = vld [vmem:[%s1 + $0x698] sm:$0xf]
    %v503 = vld [vmem:[%s1 + $0x69c] sm:$0xf]
    %v504 = vld [vmem:[%s1 + $0x6a0] sm:$0xf]
    %v505 = vld [vmem:[%s1 + $0x6a4] sm:$0xf]
    %v506 = vld [vmem:[%s1 + $0x6a8] sm:$0xf]
    %v507 = vld [vmem:[%s1 + $0x6ac] sm:$0xf]
    %v508 = vld [vmem:[%s1 + $0x6b0] sm:$0xf]
    %v509 = vld [vmem:[%s1 + $0x6b4] sm:$0xf]
    %v510 = vld [vmem:[%s1 + $0x6b8] sm:$0xf]
    %v511 = vld [vmem:[%s1 + $0x6bc] sm:$0xf]
    %v512 = vld [vmem:[%s1 + $0x6c0] sm:$0xf]
    %v513 = vld [vmem:[%s1 + $0x6c4] sm:$0xf]
    %v514 = vld [vmem:[%s1 + $0x6c8] sm:$0xf]
    %v515 = vld [vmem:[%s1 + $0x6cc] sm:$0xf]
    %v516 = vld [vmem:[%s1 + $0x6d0] sm:$0xf]
    %v517 = vld [vmem:[%s1 + $0x6d4] sm:$0xf]
    %v518 = vld [vmem:[%s1 + $0x6d8] sm:$0xf]
    %v519 = vld [vmem:[%s1 + $0x6dc] sm:$0xf]
    %v520 = vld [vmem:[%s1 + $0x6e0] sm:$0xf]
    %v521 = vld [vmem:[%s1 + $0x6e4] sm:$0xf]
    %v522 = vld [vmem:[%s1 + $0x6e8] sm:$0xf]
    %v523 = vld [vmem:[%s1 + $0x6ec] sm:$0xf]
    %v524 = vld [vmem:[%s1 + $0x6f0] sm:$0xf]
    %v525 = vld [vmem:[%s1 + $0x6f4] sm:$0xf]
    %v526 = vld [vmem:[%s1 + $0x6f8] sm:$0xf]
    %v527 = vld [vmem:[%s1 + $0x6fc] sm:$0xf]
    %v528 = vld [vmem:[%s1 + $0x700] sm:$0xf]
    %v529 = vld [vmem:[%s1 + $0x704] sm:$0xf]
    %v530 = vld [vmem:[%s1 + $0x708] sm:$0xf]
    %v531 = vld [vmem:[%s1 + $0x70c] sm:$0xf]
    %v532 = vld [vmem:[%s1 + $0x710] sm:$0xf]
    %v533 = vld [vmem:[%s1 + $0x714] sm:$0xf]
    %v534 = vld [vmem:[%s1 + $0x718] sm:$0xf]
    %v535 = vld [vmem:[%s1 + $0x71c] sm:$0xf]
    %v536 = vld [vmem:[%s1 + $0x720] sm:$0xf]
    %v537 = vld [vmem:[%s1 + $0x724] sm:$0xf]
    %v538 = vld [vmem:[%s1 + $0x728] sm:$0xf]
    %v539 = vld [vmem:[%s1 + $0x72c] sm:$0xf]
    %v540 = vld [vmem:[%s1 + $0x730] sm:$0xf]
    %v541 = vld [vmem:[%s1 + $0x734] sm:$0xf]
    %v542 = vld [vmem:[%s1 + $0x738] sm:$0xf]
    %v543 = vld [vmem:[%s1 + $0x73c] sm:$0xf]
    %v544 = vld [vmem:[%s2] sm:$0x1]
    %v546 = vlaneseq
    %v547 = vshrl.u32 %v546, 7
    %v548 = vsub.s32 0, %v547
    %v549 = vrot.slane %v544, %v548
    %v1015 = vunpack.c.l.b16 %v80
    %v1016 = vunpack.c.l.b16 %v81
    %v1017 = vunpack.c.l.b16 %v82
    %v1018 = vunpack.c.l.b16 %v83
    %v1019 = vunpack.c.l.b16 %v84
    %v1020 = vunpack.c.l.b16 %v85
    %v1021 = vunpack.c.l.b16 %v86
    %v1022 = vunpack.c.l.b16 %v87
    %v1023 = vunpack.c.l.b16 %v88
    %v1024 = vunpack.c.l.b16 %v89
    %v1025 = vunpack.c.l.b16 %v90
    %v1026 = vunpack.c.l.b16 %v91
    %v1027 = vunpack.c.l.b16 %v92
    %v1028 = vunpack.c.l.b16 %v93
    %v1029 = vunpack.c.l.b16 %v94
    %v1030 = vunpack.c.l.b16 %v95
    %v1031 = vunpack.c.l.b16 %v96
    %v1032 = vunpack.c.l.b16 %v97
    %v1033 = vunpack.c.l.b16 %v98
    %v1034 = vunpack.c.l.b16 %v99
    %v1035 = vunpack.c.l.b16 %v100
    %v1036 = vunpack.c.l.b16 %v101
    %v1037 = vunpack.c.l.b16 %v102
    %v1038 = vunpack.c.l.b16 %v103
    %v1039 = vunpack.c.l.b16 %v104
    %v1040 = vunpack.c.l.b16 %v105
    %v1041 = vunpack.c.l.b16 %v106
    %v1042 = vunpack.c.l.b16 %v107
    %v1043 = vunpack.c.l.b16 %v108
    %v1044 = vunpack.c.l.b16 %v109
    %v1045 = vunpack.c.l.b16 %v110
    %v1046 = vunpack.c.l.b16 %v111
    %v1047 = vunpack.c.l.b16 %v112
    %v1048 = vunpack.c.l.b16 %v113
    %v1049 = vunpack.c.l.b16 %v114
    %v1050 = vunpack.c.l.b16 %v115
    %v1051 = vunpack.c.l.b16 %v116
    %v1052 = vunpack.c.l.b16 %v117
    %v1053 = vunpack.c.l.b16 %v118
    %v1054 = vunpack.c.l.b16 %v119
    %v1055 = vunpack.c.l.b16 %v120
    %v1056 = vunpack.c.l.b16 %v121
    %v1057 = vunpack.c.l.b16 %v122
    %v1058 = vunpack.c.l.b16 %v123
    %v1059 = vunpack.c.l.b16 %v124
    %v1060 = vunpack.c.l.b16 %v125
    %v1061 = vunpack.c.l.b16 %v126
    %v1062 = vunpack.c.l.b16 %v127
    %v1063 = vunpack.c.l.b16 %v128
    %v1064 = vunpack.c.l.b16 %v129
    %v1065 = vunpack.c.l.b16 %v130
    %v1066 = vunpack.c.l.b16 %v131
    %v1067 = vunpack.c.l.b16 %v132
    %v1068 = vunpack.c.l.b16 %v133
    %v1069 = vunpack.c.l.b16 %v134
    %v1070 = vunpack.c.l.b16 %v135
    %v1071 = vunpack.c.l.b16 %v136
    %v1072 = vunpack.c.l.b16 %v137
    %v1073 = vunpack.c.l.b16 %v138
    %v1074 = vunpack.c.l.b16 %v139
    %v1075 = vunpack.c.l.b16 %v140
    %v1076 = vunpack.c.l.b16 %v141
    %v1077 = vunpack.c.l.b16 %v142
    %v1078 = vunpack.c.l.b16 %v143
    %v1079 = vunpack.c.l.b16 %v144
    %v1080 = vunpack.c.l.b16 %v145
    %v1081 = vunpack.c.l.b16 %v146
    %v1082 = vunpack.c.l.b16 %v147
    %v1083 = vunpack.c.l.b16 %v148
    %v1084 = vunpack.c.l.b16 %v149
    %v1085 = vunpack.c.l.b16 %v150
    %v1086 = vunpack.c.l.b16 %v151
    %v1087 = vunpack.c.l.b16 %v152
    %v1088 = vunpack.c.l.b16 %v153
    %v1089 = vunpack.c.l.b16 %v154
    %v1090 = vunpack.c.l.b16 %v155
    %v1091 = vunpack.c.l.b16 %v156
    %v1092 = vunpack.c.l.b16 %v157
    %v1093 = vunpack.c.l.b16 %v158
    %v1094 = vunpack.c.l.b16 %v159
    %v1095 = vunpack.c.l.b16 %v160
    %v1096 = vunpack.c.l.b16 %v161
    %v1097 = vunpack.c.l.b16 %v162
    %v1098 = vunpack.c.l.b16 %v163
    %v1099 = vunpack.c.l.b16 %v164
    %v1100 = vunpack.c.l.b16 %v165
    %v1101 = vunpack.c.l.b16 %v166
    %v1102 = vunpack.c.l.b16 %v167
    %v1103 = vunpack.c.l.b16 %v168
    %v1104 = vunpack.c.l.b16 %v169
    %v1105 = vunpack.c.l.b16 %v170
    %v1106 = vunpack.c.l.b16 %v171
    %v1107 = vunpack.c.l.b16 %v172
    %v1108 = vunpack.c.l.b16 %v173
    %v1109 = vunpack.c.l.b16 %v174
    %v1110 = vunpack.c.l.b16 %v175
    %v1111 = vunpack.c.l.b16 %v176
    %v1112 = vunpack.c.l.b16 %v177
    %v1113 = vunpack.c.l.b16 %v178
    %v1114 = vunpack.c.l.b16 %v179
    %v1115 = vunpack.c.l.b16 %v180
    %v1116 = vunpack.c.l.b16 %v181
    %v1117 = vunpack.c.l.b16 %v182
    %v1118 = vunpack.c.l.b16 %v183
    %v1119 = vunpack.c.l.b16 %v184
    %v1120 = vunpack.c.l.b16 %v185
    %v1121 = vunpack.c.l.b16 %v186
    %v1122 = vunpack.c.l.b16 %v187
    %v1123 = vunpack.c.l.b16 %v188
    %v1124 = vunpack.c.l.b16 %v189
    %v1125 = vunpack.c.l.b16 %v190
    %v1126 = vunpack.c.l.b16 %v191
    %v1127 = vunpack.c.l.b16 %v192
    %v1128 = vunpack.c.l.b16 %v193
    %v1129 = vunpack.c.l.b16 %v194
    %v1130 = vunpack.c.l.b16 %v195
    %v1131 = vunpack.c.l.b16 %v196
    %v1132 = vunpack.c.l.b16 %v197
    %v1133 = vunpack.c.l.b16 %v198
    %v1134 = vunpack.c.l.b16 %v199
    %v1135 = vunpack.c.l.b16 %v200
    %v1136 = vunpack.c.l.b16 %v201
    %v1137 = vunpack.c.l.b16 %v202
    %v1138 = vunpack.c.l.b16 %v203
    %v1139 = vunpack.c.l.b16 %v204
    %v1140 = vunpack.c.l.b16 %v205
    %v1141 = vunpack.c.l.b16 %v206
    %v1142 = vunpack.c.l.b16 %v207
    %v1143 = vunpack.c.l.b16 %v208
    %v1144 = vunpack.c.l.b16 %v209
    %v1145 = vunpack.c.l.b16 %v210
    %v1146 = vunpack.c.l.b16 %v211
    %v1147 = vunpack.c.l.b16 %v212
    %v1148 = vunpack.c.l.b16 %v213
    %v1149 = vunpack.c.l.b16 %v214
    %v1150 = vunpack.c.l.b16 %v215
    %v1151 = vunpack.c.l.b16 %v216
    %v1152 = vunpack.c.l.b16 %v217
    %v1153 = vunpack.c.l.b16 %v218
    %v1154 = vunpack.c.l.b16 %v219
    %v1155 = vunpack.c.l.b16 %v220
    %v1156 = vunpack.c.l.b16 %v221
    %v1157 = vunpack.c.l.b16 %v222
    %v1158 = vunpack.c.l.b16 %v223
    %v1159 = vunpack.c.l.b16 %v224
    %v1160 = vunpack.c.l.b16 %v225
    %v1161 = vunpack.c.l.b16 %v226
    %v1162 = vunpack.c.l.b16 %v227
    %v1163 = vunpack.c.l.b16 %v228
    %v1164 = vunpack.c.l.b16 %v229
    %v1165 = vunpack.c.l.b16 %v230
    %v1166 = vunpack.c.l.b16 %v231
    %v1167 = vunpack.c.l.b16 %v232
    %v1168 = vunpack.c.l.b16 %v233
    %v1169 = vunpack.c.l.b16 %v234
    %v1170 = vunpack.c.l.b16 %v235
    %v1171 = vunpack.c.l.b16 %v236
    %v1172 = vunpack.c.l.b16 %v237
    %v1173 = vunpack.c.l.b16 %v238
    %v1174 = vunpack.c.l.b16 %v239
    %v1175 = vunpack.c.l.b16 %v240
    %v1176 = vunpack.c.l.b16 %v241
    %v1177 = vunpack.c.l.b16 %v242
    %v1178 = vunpack.c.l.b16 %v243
    %v1179 = vunpack.c.l.b16 %v244
    %v1180 = vunpack.c.l.b16 %v245
    %v1181 = vunpack.c.l.b16 %v246
    %v1182 = vunpack.c.l.b16 %v247
    %v1183 = vunpack.c.l.b16 %v248
    %v1184 = vunpack.c.l.b16 %v249
    %v1185 = vunpack.c.l.b16 %v250
    %v1186 = vunpack.c.l.b16 %v251
    %v1187 = vunpack.c.l.b16 %v252
    %v1188 = vunpack.c.l.b16 %v253
    %v1189 = vunpack.c.l.b16 %v254
    %v1190 = vunpack.c.l.b16 %v255
    %v1191 = vunpack.c.l.b16 %v256
    %v1192 = vunpack.c.l.b16 %v257
    %v1193 = vunpack.c.l.b16 %v258
    %v1194 = vunpack.c.l.b16 %v259
    %v1195 = vunpack.c.l.b16 %v260
    %v1196 = vunpack.c.l.b16 %v261
    %v1197 = vunpack.c.l.b16 %v262
    %v1198 = vunpack.c.l.b16 %v263
    %v1199 = vunpack.c.l.b16 %v264
    %v1200 = vunpack.c.l.b16 %v265
    %v1201 = vunpack.c.l.b16 %v266
    %v1202 = vunpack.c.l.b16 %v267
    %v1203 = vunpack.c.l.b16 %v268
    %v1204 = vunpack.c.l.b16 %v269
    %v1205 = vunpack.c.l.b16 %v270
    %v1206 = vunpack.c.l.b16 %v271
    %v1207 = vunpack.c.l.b16 %v272
    %v1208 = vunpack.c.l.b16 %v273
    %v1209 = vunpack.c.l.b16 %v274
    %v1210 = vunpack.c.l.b16 %v275
    %v1211 = vunpack.c.l.b16 %v276
    %v1212 = vunpack.c.l.b16 %v277
    %v1213 = vunpack.c.l.b16 %v278
    %v1214 = vunpack.c.l.b16 %v279
    %v1215 = vunpack.c.l.b16 %v280
    %v1216 = vunpack.c.l.b16 %v281
    %v1217 = vunpack.c.l.b16 %v282
    %v1218 = vunpack.c.l.b16 %v283
    %v1219 = vunpack.c.l.b16 %v284
    %v1220 = vunpack.c.l.b16 %v285
    %v1221 = vunpack.c.l.b16 %v286
    %v1222 = vunpack.c.l.b16 %v287
    %v1223 = vunpack.c.l.b16 %v288
    %v1224 = vunpack.c.l.b16 %v289
    %v1225 = vunpack.c.l.b16 %v290
    %v1226 = vunpack.c.l.b16 %v291
    %v1227 = vunpack.c.l.b16 %v292
    %v1228 = vunpack.c.l.b16 %v293
    %v1229 = vunpack.c.l.b16 %v294
    %v1230 = vunpack.c.l.b16 %v295
    %v1231 = vunpack.c.l.b16 %v296
    %v1232 = vunpack.c.l.b16 %v297
    %v1233 = vunpack.c.l.b16 %v298
    %v1234 = vunpack.c.l.b16 %v299
    %v1235 = vunpack.c.l.b16 %v300
    %v1236 = vunpack.c.l.b16 %v301
    %v1237 = vunpack.c.l.b16 %v302
    %v1238 = vunpack.c.l.b16 %v303
    %v1239 = vunpack.c.l.b16 %v304
    %v1240 = vunpack.c.l.b16 %v305
    %v1241 = vunpack.c.l.b16 %v306
    %v1242 = vunpack.c.l.b16 %v307
    %v1243 = vunpack.c.l.b16 %v308
    %v1244 = vunpack.c.l.b16 %v309
    %v1245 = vunpack.c.l.b16 %v310
    %v1246 = vunpack.c.l.b16 %v311
    %v1247 = vunpack.c.l.b16 %v312
    %v1248 = vunpack.c.l.b16 %v313
    %v1249 = vunpack.c.l.b16 %v314
    %v1250 = vunpack.c.l.b16 %v315
    %v1251 = vunpack.c.l.b16 %v316
    %v1252 = vunpack.c.l.b16 %v317
    %v1253 = vunpack.c.l.b16 %v318
    %v1254 = vunpack.c.l.b16 %v319
    %v1255 = vunpack.c.l.b16 %v320
    %v1256 = vunpack.c.l.b16 %v321
    %v1257 = vunpack.c.l.b16 %v322
    %v1258 = vunpack.c.l.b16 %v323
    %v1259 = vunpack.c.l.b16 %v324
    %v1260 = vunpack.c.l.b16 %v325
    %v1261 = vunpack.c.l.b16 %v326
    %v1262 = vunpack.c.l.b16 %v327
    %v1263 = vunpack.c.l.b16 %v328
    %v1264 = vunpack.c.l.b16 %v329
    %v1265 = vunpack.c.l.b16 %v330
    %v1266 = vunpack.c.l.b16 %v331
    %v1267 = vunpack.c.l.b16 %v332
    %v1268 = vunpack.c.l.b16 %v333
    %v1269 = vunpack.c.l.b16 %v334
    %v1270 = vunpack.c.l.b16 %v335
    %v1271 = vunpack.c.l.b16 %v336
    %v1272 = vunpack.c.l.b16 %v337
    %v1273 = vunpack.c.l.b16 %v338
    %v1274 = vunpack.c.l.b16 %v339
    %v1275 = vunpack.c.l.b16 %v340
    %v1276 = vunpack.c.l.b16 %v341
    %v1277 = vunpack.c.l.b16 %v342
    %v1278 = vunpack.c.l.b16 %v343
    %v1279 = vunpack.c.l.b16 %v344
    %v1280 = vunpack.c.l.b16 %v345
    %v1281 = vunpack.c.l.b16 %v346
    %v1282 = vunpack.c.l.b16 %v347
    %v1283 = vunpack.c.l.b16 %v348
    %v1284 = vunpack.c.l.b16 %v349
    %v1285 = vunpack.c.l.b16 %v350
    %v1286 = vunpack.c.l.b16 %v351
    %v1287 = vunpack.c.l.b16 %v352
    %v1288 = vunpack.c.l.b16 %v353
    %v1289 = vunpack.c.l.b16 %v354
    %v1290 = vunpack.c.l.b16 %v355
    %v1291 = vunpack.c.l.b16 %v356
    %v1292 = vunpack.c.l.b16 %v357
    %v1293 = vunpack.c.l.b16 %v358
    %v1294 = vunpack.c.l.b16 %v359
    %v1295 = vunpack.c.l.b16 %v360
    %v1296 = vunpack.c.l.b16 %v361
    %v1297 = vunpack.c.l.b16 %v362
    %v1298 = vunpack.c.l.b16 %v363
    %v1299 = vunpack.c.l.b16 %v364
    %v1300 = vunpack.c.l.b16 %v365
    %v1301 = vunpack.c.l.b16 %v366
    %v1302 = vunpack.c.l.b16 %v367
    %v1303 = vunpack.c.l.b16 %v368
    %v1304 = vunpack.c.l.b16 %v369
    %v1305 = vunpack.c.l.b16 %v370
    %v1306 = vunpack.c.l.b16 %v371
    %v1307 = vunpack.c.l.b16 %v372
    %v1308 = vunpack.c.l.b16 %v373
    %v1309 = vunpack.c.l.b16 %v374
    %v1310 = vunpack.c.l.b16 %v375
    %v1311 = vunpack.c.l.b16 %v376
    %v1312 = vunpack.c.l.b16 %v377
    %v1313 = vunpack.c.l.b16 %v378
    %v1314 = vunpack.c.l.b16 %v379
    %v1315 = vunpack.c.l.b16 %v380
    %v1316 = vunpack.c.l.b16 %v381
    %v1317 = vunpack.c.l.b16 %v382
    %v1318 = vunpack.c.l.b16 %v383
    %v1319 = vunpack.c.l.b16 %v384
    %v1320 = vunpack.c.l.b16 %v385
    %v1321 = vunpack.c.l.b16 %v386
    %v1322 = vunpack.c.l.b16 %v387
    %v1323 = vunpack.c.l.b16 %v388
    %v1324 = vunpack.c.l.b16 %v389
    %v1325 = vunpack.c.l.b16 %v390
    %v1326 = vunpack.c.l.b16 %v391
    %v1327 = vunpack.c.l.b16 %v392
    %v1328 = vunpack.c.l.b16 %v393
    %v1329 = vunpack.c.l.b16 %v394
    %v1330 = vunpack.c.l.b16 %v395
    %v1331 = vunpack.c.l.b16 %v396
    %v1332 = vunpack.c.l.b16 %v397
    %v1333 = vunpack.c.l.b16 %v398
    %v1334 = vunpack.c.l.b16 %v399
    %v1335 = vunpack.c.l.b16 %v400
    %v1336 = vunpack.c.l.b16 %v401
    %v1337 = vunpack.c.l.b16 %v402
    %v1338 = vunpack.c.l.b16 %v403
    %v1339 = vunpack.c.l.b16 %v404
    %v1340 = vunpack.c.l.b16 %v405
    %v1341 = vunpack.c.l.b16 %v406
    %v1342 = vunpack.c.l.b16 %v407
    %v1343 = vunpack.c.l.b16 %v408
    %v1344 = vunpack.c.l.b16 %v409
    %v1345 = vunpack.c.l.b16 %v410
    %v1346 = vunpack.c.l.b16 %v411
    %v1347 = vunpack.c.l.b16 %v412
    %v1348 = vunpack.c.l.b16 %v413
    %v1349 = vunpack.c.l.b16 %v414
    %v1350 = vunpack.c.l.b16 %v415
    %v1351 = vunpack.c.l.b16 %v416
    %v1352 = vunpack.c.l.b16 %v417
    %v1353 = vunpack.c.l.b16 %v418
    %v1354 = vunpack.c.l.b16 %v419
    %v1355 = vunpack.c.l.b16 %v420
    %v1356 = vunpack.c.l.b16 %v421
    %v1357 = vunpack.c.l.b16 %v422
    %v1358 = vunpack.c.l.b16 %v423
    %v1359 = vunpack.c.l.b16 %v424
    %v1360 = vunpack.c.l.b16 %v425
    %v1361 = vunpack.c.l.b16 %v426
    %v1362 = vunpack.c.l.b16 %v427
    %v1363 = vunpack.c.l.b16 %v428
    %v1364 = vunpack.c.l.b16 %v429
    %v1365 = vunpack.c.l.b16 %v430
    %v1366 = vunpack.c.l.b16 %v431
    %v1367 = vunpack.c.l.b16 %v432
    %v1368 = vunpack.c.l.b16 %v433
    %v1369 = vunpack.c.l.b16 %v434
    %v1370 = vunpack.c.l.b16 %v435
    %v1371 = vunpack.c.l.b16 %v436
    %v1372 = vunpack.c.l.b16 %v437
    %v1373 = vunpack.c.l.b16 %v438
    %v1374 = vunpack.c.l.b16 %v439
    %v1375 = vunpack.c.l.b16 %v440
    %v1376 = vunpack.c.l.b16 %v441
    %v1377 = vunpack.c.l.b16 %v442
    %v1378 = vunpack.c.l.b16 %v443
    %v1379 = vunpack.c.l.b16 %v444
    %v1380 = vunpack.c.l.b16 %v445
    %v1381 = vunpack.c.l.b16 %v446
    %v1382 = vunpack.c.l.b16 %v447
    %v1383 = vunpack.c.l.b16 %v448
    %v1384 = vunpack.c.l.b16 %v449
    %v1385 = vunpack.c.l.b16 %v450
    %v1386 = vunpack.c.l.b16 %v451
    %v1387 = vunpack.c.l.b16 %v452
    %v1388 = vunpack.c.l.b16 %v453
    %v1389 = vunpack.c.l.b16 %v454
    %v1390 = vunpack.c.l.b16 %v455
    %v1391 = vunpack.c.l.b16 %v456
    %v1392 = vunpack.c.l.b16 %v457
    %v1393 = vunpack.c.l.b16 %v458
    %v1394 = vunpack.c.l.b16 %v459
    %v1395 = vunpack.c.l.b16 %v460
    %v1396 = vunpack.c.l.b16 %v461
    %v1397 = vunpack.c.l.b16 %v462
    %v1398 = vunpack.c.l.b16 %v463
    %v1399 = vunpack.c.l.b16 %v464
    %v1400 = vunpack.c.l.b16 %v465
    %v1401 = vunpack.c.l.b16 %v466
    %v1402 = vunpack.c.l.b16 %v467
    %v1403 = vunpack.c.l.b16 %v468
    %v1404 = vunpack.c.l.b16 %v469
    %v1405 = vunpack.c.l.b16 %v470
    %v1406 = vunpack.c.l.b16 %v471
    %v1407 = vunpack.c.l.b16 %v472
    %v1408 = vunpack.c.l.b16 %v473
    %v1409 = vunpack.c.l.b16 %v474
    %v1410 = vunpack.c.l.b16 %v475
    %v1411 = vunpack.c.l.b16 %v476
    %v1412 = vunpack.c.l.b16 %v477
    %v1413 = vunpack.c.l.b16 %v478
    %v1414 = vunpack.c.l.b16 %v479
    %v1415 = vunpack.c.l.b16 %v480
    %v1416 = vunpack.c.l.b16 %v481
    %v1417 = vunpack.c.l.b16 %v482
    %v1418 = vunpack.c.l.b16 %v483
    %v1419 = vunpack.c.l.b16 %v484
    %v1420 = vunpack.c.l.b16 %v485
    %v1421 = vunpack.c.l.b16 %v486
    %v1422 = vunpack.c.l.b16 %v487
    %v1423 = vunpack.c.l.b16 %v488
    %v1424 = vunpack.c.l.b16 %v489
    %v1425 = vunpack.c.l.b16 %v490
    %v1426 = vunpack.c.l.b16 %v491
    %v1427 = vunpack.c.l.b16 %v492
    %v1428 = vunpack.c.l.b16 %v493
    %v1429 = vunpack.c.l.b16 %v494
    %v1430 = vunpack.c.l.b16 %v495
    %v1431 = vunpack.c.l.b16 %v496
    %v1432 = vunpack.c.l.b16 %v497
    %v1433 = vunpack.c.l.b16 %v498
    %v1434 = vunpack.c.l.b16 %v499
    %v1435 = vunpack.c.l.b16 %v500
    %v1436 = vunpack.c.l.b16 %v501
    %v1437 = vunpack.c.l.b16 %v502
    %v1438 = vunpack.c.l.b16 %v503
    %v1439 = vunpack.c.l.b16 %v504
    %v1440 = vunpack.c.l.b16 %v505
    %v1441 = vunpack.c.l.b16 %v506
    %v1442 = vunpack.c.l.b16 %v507
    %v1443 = vunpack.c.l.b16 %v508
    %v1444 = vunpack.c.l.b16 %v509
    %v1445 = vunpack.c.l.b16 %v510
    %v1446 = vunpack.c.l.b16 %v511
    %v1447 = vunpack.c.l.b16 %v512
    %v1448 = vunpack.c.l.b16 %v513
    %v1449 = vunpack.c.l.b16 %v514
    %v1450 = vunpack.c.l.b16 %v515
    %v1451 = vunpack.c.l.b16 %v516
    %v1452 = vunpack.c.l.b16 %v517
    %v1453 = vunpack.c.l.b16 %v518
    %v1454 = vunpack.c.l.b16 %v519
    %v1455 = vunpack.c.l.b16 %v520
    %v1456 = vunpack.c.l.b16 %v521
    %v1457 = vunpack.c.l.b16 %v522
    %v1458 = vunpack.c.l.b16 %v523
    %v1459 = vunpack.c.l.b16 %v524
    %v1460 = vunpack.c.l.b16 %v525
    %v1461 = vunpack.c.l.b16 %v526
    %v1462 = vunpack.c.l.b16 %v527
    %v1463 = vunpack.c.l.b16 %v528
    %v1464 = vunpack.c.l.b16 %v529
    %v1465 = vunpack.c.l.b16 %v530
    %v1466 = vunpack.c.l.b16 %v531
    %v1467 = vunpack.c.l.b16 %v532
    %v1468 = vunpack.c.l.b16 %v533
    %v1469 = vunpack.c.l.b16 %v534
    %v1470 = vunpack.c.l.b16 %v535
    %v1471 = vunpack.c.l.b16 %v536
    %v1472 = vunpack.c.l.b16 %v537
    %v1473 = vunpack.c.l.b16 %v538
    %v1474 = vunpack.c.l.b16 %v539
    %v1475 = vunpack.c.l.b16 %v540
    %v1476 = vunpack.c.l.b16 %v541
    %v1477 = vunpack.c.l.b16 %v542
    %v1478 = vunpack.c.l.b16 %v543
    %v1479 = vpack.c.b16 %v1016, %v1015
    %v1480 = vpack.c.b16 %v1018, %v1017
    %v1481 = vpack.c.b16 %v1020, %v1019
    %v1482 = vpack.c.b16 %v1022, %v1021
    %v1483 = vpack.c.b16 %v1024, %v1023
    %v1484 = vpack.c.b16 %v1026, %v1025
    %v1485 = vpack.c.b16 %v1028, %v1027
    %v1486 = vpack.c.b16 %v1030, %v1029
    %v1487 = vpack.c.b16 %v1032, %v1031
    %v1488 = vpack.c.b16 %v1034, %v1033
    %v1489 = vpack.c.b16 %v1036, %v1035
    %v1490 = vpack.c.b16 %v1038, %v1037
    %v1491 = vpack.c.b16 %v1040, %v1039
    %v1492 = vpack.c.b16 %v1042, %v1041
    %v1493 = vpack.c.b16 %v1044, %v1043
    %v1494 = vpack.c.b16 %v1046, %v1045
    %v1495 = vpack.c.b16 %v1048, %v1047
    %v1496 = vpack.c.b16 %v1050, %v1049
    %v1497 = vpack.c.b16 %v1052, %v1051
    %v1498 = vpack.c.b16 %v1054, %v1053
    %v1499 = vpack.c.b16 %v1056, %v1055
    %v1500 = vpack.c.b16 %v1058, %v1057
    %v1501 = vpack.c.b16 %v1060, %v1059
    %v1502 = vpack.c.b16 %v1062, %v1061
    %v1503 = vpack.c.b16 %v1064, %v1063
    %v1504 = vpack.c.b16 %v1066, %v1065
    %v1505 = vpack.c.b16 %v1068, %v1067
    %v1506 = vpack.c.b16 %v1070, %v1069
    %v1507 = vpack.c.b16 %v1072, %v1071
    %v1508 = vpack.c.b16 %v1074, %v1073
    %v1509 = vpack.c.b16 %v1076, %v1075
    %v1510 = vpack.c.b16 %v1078, %v1077
    %v1511 = vpack.c.b16 %v1080, %v1079
    %v1512 = vpack.c.b16 %v1082, %v1081
    %v1513 = vpack.c.b16 %v1084, %v1083
    %v1514 = vpack.c.b16 %v1086, %v1085
    %v1515 = vpack.c.b16 %v1088, %v1087
    %v1516 = vpack.c.b16 %v1090, %v1089
    %v1517 = vpack.c.b16 %v1092, %v1091
    %v1518 = vpack.c.b16 %v1094, %v1093
    %v1519 = vpack.c.b16 %v1096, %v1095
    %v1520 = vpack.c.b16 %v1098, %v1097
    %v1521 = vpack.c.b16 %v1100, %v1099
    %v1522 = vpack.c.b16 %v1102, %v1101
    %v1523 = vpack.c.b16 %v1104, %v1103
    %v1524 = vpack.c.b16 %v1106, %v1105
    %v1525 = vpack.c.b16 %v1108, %v1107
    %v1526 = vpack.c.b16 %v1110, %v1109
    %v1527 = vpack.c.b16 %v1112, %v1111
    %v1528 = vpack.c.b16 %v1114, %v1113
    %v1529 = vpack.c.b16 %v1116, %v1115
    %v1530 = vpack.c.b16 %v1118, %v1117
    %v1531 = vpack.c.b16 %v1120, %v1119
    %v1532 = vpack.c.b16 %v1122, %v1121
    %v1533 = vpack.c.b16 %v1124, %v1123
    %v1534 = vpack.c.b16 %v1126, %v1125
    %v1535 = vpack.c.b16 %v1128, %v1127
    %v1536 = vpack.c.b16 %v1130, %v1129
    %v1537 = vpack.c.b16 %v1132, %v1131
    %v1538 = vpack.c.b16 %v1134, %v1133
    %v1539 = vpack.c.b16 %v1136, %v1135
    %v1540 = vpack.c.b16 %v1138, %v1137
    %v1541 = vpack.c.b16 %v1140, %v1139
    %v1542 = vpack.c.b16 %v1142, %v1141
    %v1543 = vpack.c.b16 %v1144, %v1143
    %v1544 = vpack.c.b16 %v1146, %v1145
    %v1545 = vpack.c.b16 %v1148, %v1147
    %v1546 = vpack.c.b16 %v1150, %v1149
    %v1547 = vpack.c.b16 %v1152, %v1151
    %v1548 = vpack.c.b16 %v1154, %v1153
    %v1549 = vpack.c.b16 %v1156, %v1155
    %v1550 = vpack.c.b16 %v1158, %v1157
    %v1551 = vpack.c.b16 %v1160, %v1159
    %v1552 = vpack.c.b16 %v1162, %v1161
    %v1553 = vpack.c.b16 %v1164, %v1163
    %v1554 = vpack.c.b16 %v1166, %v1165
    %v1555 = vpack.c.b16 %v1168, %v1167
    %v1556 = vpack.c.b16 %v1170, %v1169
    %v1557 = vpack.c.b16 %v1172, %v1171
    %v1558 = vpack.c.b16 %v1174, %v1173
    %v1559 = vpack.c.b16 %v1176, %v1175
    %v1560 = vpack.c.b16 %v1178, %v1177
    %v1561 = vpack.c.b16 %v1180, %v1179
    %v1562 = vpack.c.b16 %v1182, %v1181
    %v1563 = vpack.c.b16 %v1184, %v1183
    %v1564 = vpack.c.b16 %v1186, %v1185
    %v1565 = vpack.c.b16 %v1188, %v1187
    %v1566 = vpack.c.b16 %v1190, %v1189
    %v1567 = vpack.c.b16 %v1192, %v1191
    %v1568 = vpack.c.b16 %v1194, %v1193
    %v1569 = vpack.c.b16 %v1196, %v1195
    %v1570 = vpack.c.b16 %v1198, %v1197
    %v1571 = vpack.c.b16 %v1200, %v1199
    %v1572 = vpack.c.b16 %v1202, %v1201
    %v1573 = vpack.c.b16 %v1204, %v1203
    %v1574 = vpack.c.b16 %v1206, %v1205
    %v1575 = vpack.c.b16 %v1208, %v1207
    %v1576 = vpack.c.b16 %v1210, %v1209
    %v1577 = vpack.c.b16 %v1212, %v1211
    %v1578 = vpack.c.b16 %v1214, %v1213
    %v1579 = vpack.c.b16 %v1216, %v1215
    %v1580 = vpack.c.b16 %v1218, %v1217
    %v1581 = vpack.c.b16 %v1220, %v1219
    %v1582 = vpack.c.b16 %v1222, %v1221
    %v1583 = vpack.c.b16 %v1224, %v1223
    %v1584 = vpack.c.b16 %v1226, %v1225
    %v1585 = vpack.c.b16 %v1228, %v1227
    %v1586 = vpack.c.b16 %v1230, %v1229
    %v1587 = vpack.c.b16 %v1232, %v1231
    %v1588 = vpack.c.b16 %v1234, %v1233
    %v1589 = vpack.c.b16 %v1236, %v1235
    %v1590 = vpack.c.b16 %v1238, %v1237
    %v1591 = vpack.c.b16 %v1240, %v1239
    %v1592 = vpack.c.b16 %v1242, %v1241
    %v1593 = vpack.c.b16 %v1244, %v1243
    %v1594 = vpack.c.b16 %v1246, %v1245
    %v1595 = vpack.c.b16 %v1248, %v1247
    %v1596 = vpack.c.b16 %v1250, %v1249
    %v1597 = vpack.c.b16 %v1252, %v1251
    %v1598 = vpack.c.b16 %v1254, %v1253
    %v1599 = vpack.c.b16 %v1256, %v1255
    %v1600 = vpack.c.b16 %v1258, %v1257
    %v1601 = vpack.c.b16 %v1260, %v1259
    %v1602 = vpack.c.b16 %v1262, %v1261
    %v1603 = vpack.c.b16 %v1264, %v1263
    %v1604 = vpack.c.b16 %v1266, %v1265
    %v1605 = vpack.c.b16 %v1268, %v1267
    %v1606 = vpack.c.b16 %v1270, %v1269
    %v1607 = vpack.c.b16 %v1272, %v1271
    %v1608 = vpack.c.b16 %v1274, %v1273
    %v1609 = vpack.c.b16 %v1276, %v1275
    %v1610 = vpack.c.b16 %v1278, %v1277
    %v1611 = vpack.c.b16 %v1280, %v1279
    %v1612 = vpack.c.b16 %v1282, %v1281
    %v1613 = vpack.c.b16 %v1284, %v1283
    %v1614 = vpack.c.b16 %v1286, %v1285
    %v1615 = vpack.c.b16 %v1288, %v1287
    %v1616 = vpack.c.b16 %v1290, %v1289
    %v1617 = vpack.c.b16 %v1292, %v1291
    %v1618 = vpack.c.b16 %v1294, %v1293
    %v1619 = vpack.c.b16 %v1296, %v1295
    %v1620 = vpack.c.b16 %v1298, %v1297
    %v1621 = vpack.c.b16 %v1300, %v1299
    %v1622 = vpack.c.b16 %v1302, %v1301
    %v1623 = vpack.c.b16 %v1304, %v1303
    %v1624 = vpack.c.b16 %v1306, %v1305
    %v1625 = vpack.c.b16 %v1308, %v1307
    %v1626 = vpack.c.b16 %v1310, %v1309
    %v1627 = vpack.c.b16 %v1312, %v1311
    %v1628 = vpack.c.b16 %v1314, %v1313
    %v1629 = vpack.c.b16 %v1316, %v1315
    %v1630 = vpack.c.b16 %v1318, %v1317
    %v1631 = vpack.c.b16 %v1320, %v1319
    %v1632 = vpack.c.b16 %v1322, %v1321
    %v1633 = vpack.c.b16 %v1324, %v1323
    %v1634 = vpack.c.b16 %v1326, %v1325
    %v1635 = vpack.c.b16 %v1328, %v1327
    %v1636 = vpack.c.b16 %v1330, %v1329
    %v1637 = vpack.c.b16 %v1332, %v1331
    %v1638 = vpack.c.b16 %v1334, %v1333
    %v1639 = vpack.c.b16 %v1336, %v1335
    %v1640 = vpack.c.b16 %v1338, %v1337
    %v1641 = vpack.c.b16 %v1340, %v1339
    %v1642 = vpack.c.b16 %v1342, %v1341
    %v1643 = vpack.c.b16 %v1344, %v1343
    %v1644 = vpack.c.b16 %v1346, %v1345
    %v1645 = vpack.c.b16 %v1348, %v1347
    %v1646 = vpack.c.b16 %v1350, %v1349
    %v1647 = vpack.c.b16 %v1352, %v1351
    %v1648 = vpack.c.b16 %v1354, %v1353
    %v1649 = vpack.c.b16 %v1356, %v1355
    %v1650 = vpack.c.b16 %v1358, %v1357
    %v1651 = vpack.c.b16 %v1360, %v1359
    %v1652 = vpack.c.b16 %v1362, %v1361
    %v1653 = vpack.c.b16 %v1364, %v1363
    %v1654 = vpack.c.b16 %v1366, %v1365
    %v1655 = vpack.c.b16 %v1368, %v1367
    %v1656 = vpack.c.b16 %v1370, %v1369
    %v1657 = vpack.c.b16 %v1372, %v1371
    %v1658 = vpack.c.b16 %v1374, %v1373
    %v1659 = vpack.c.b16 %v1376, %v1375
    %v1660 = vpack.c.b16 %v1378, %v1377
    %v1661 = vpack.c.b16 %v1380, %v1379
    %v1662 = vpack.c.b16 %v1382, %v1381
    %v1663 = vpack.c.b16 %v1384, %v1383
    %v1664 = vpack.c.b16 %v1386, %v1385
    %v1665 = vpack.c.b16 %v1388, %v1387
    %v1666 = vpack.c.b16 %v1390, %v1389
    %v1667 = vpack.c.b16 %v1392, %v1391
    %v1668 = vpack.c.b16 %v1394, %v1393
    %v1669 = vpack.c.b16 %v1396, %v1395
    %v1670 = vpack.c.b16 %v1398, %v1397
    %v1671 = vpack.c.b16 %v1400, %v1399
    %v1672 = vpack.c.b16 %v1402, %v1401
    %v1673 = vpack.c.b16 %v1404, %v1403
    %v1674 = vpack.c.b16 %v1406, %v1405
    %v1675 = vpack.c.b16 %v1408, %v1407
    %v1676 = vpack.c.b16 %v1410, %v1409
    %v1677 = vpack.c.b16 %v1412, %v1411
    %v1678 = vpack.c.b16 %v1414, %v1413
    %v1679 = vpack.c.b16 %v1416, %v1415
    %v1680 = vpack.c.b16 %v1418, %v1417
    %v1681 = vpack.c.b16 %v1420, %v1419
    %v1682 = vpack.c.b16 %v1422, %v1421
    %v1683 = vpack.c.b16 %v1424, %v1423
    %v1684 = vpack.c.b16 %v1426, %v1425
    %v1685 = vpack.c.b16 %v1428, %v1427
    %v1686 = vpack.c.b16 %v1430, %v1429
    %v1687 = vpack.c.b16 %v1432, %v1431
    %v1688 = vpack.c.b16 %v1434, %v1433
    %v1689 = vpack.c.b16 %v1436, %v1435
    %v1690 = vpack.c.b16 %v1438, %v1437
    %v1691 = vpack.c.b16 %v1440, %v1439
    %v1692 = vpack.c.b16 %v1442, %v1441
    %v1693 = vpack.c.b16 %v1444, %v1443
    %v1694 = vpack.c.b16 %v1446, %v1445
    %v1695 = vpack.c.b16 %v1448, %v1447
    %v1696 = vpack.c.b16 %v1450, %v1449
    %v1697 = vpack.c.b16 %v1452, %v1451
    %v1698 = vpack.c.b16 %v1454, %v1453
    %v1699 = vpack.c.b16 %v1456, %v1455
    %v1700 = vpack.c.b16 %v1458, %v1457
    %v1701 = vpack.c.b16 %v1460, %v1459
    %v1702 = vpack.c.b16 %v1462, %v1461
    %v1703 = vpack.c.b16 %v1464, %v1463
    %v1704 = vpack.c.b16 %v1466, %v1465
    %v1705 = vpack.c.b16 %v1468, %v1467
    %v1706 = vpack.c.b16 %v1470, %v1469
    %v1707 = vpack.c.b16 %v1472, %v1471
    %v1708 = vpack.c.b16 %v1474, %v1473
    %v1709 = vpack.c.b16 %v1476, %v1475
    %v1710 = vpack.c.b16 %v1478, %v1477
    %1943 = vmatprep.subr.bf16.mxu0 0
    %1944 = vmatpush1.bf16.msra.mxu0 %v1479
    %1945 = vmatprep.subr.bf16.mxu0 0
    %1946 = vmatpush1.bf16.msra.mxu0 %v1480
    %1947 = vmatprep.subr.bf16.mxu0 0
    %1948 = vmatpush1.bf16.msra.mxu0 %v1481
    %1949 = vmatprep.subr.bf16.mxu0 0
    %1950 = vmatpush1.bf16.msra.mxu0 %v1482
    %1951 = vmatprep.subr.bf16.mxu0 0
    %1952 = vmatpush1.bf16.msra.mxu0 %v1483
    %1953 = vmatprep.subr.bf16.mxu0 0
    %1954 = vmatpush1.bf16.msra.mxu0 %v1484
    %1955 = vmatprep.subr.bf16.mxu0 0
    %1956 = vmatpush1.bf16.msra.mxu0 %v1485
    %1957 = vmatprep.subr.bf16.mxu0 0
    %1958 = vmatpush1.bf16.msra.mxu0 %v1486
    %1959 = vmatprep.subr.bf16.mxu0 0
    %1960 = vmatpush1.bf16.msra.mxu0 %v1487
    %1961 = vmatprep.subr.bf16.mxu0 0
    %1962 = vmatpush1.bf16.msra.mxu0 %v1488
    %1963 = vmatprep.subr.bf16.mxu0 0
    %1964 = vmatpush1.bf16.msra.mxu0 %v1489
    %1965 = vmatprep.subr.bf16.mxu0 0
    %1966 = vmatpush1.bf16.msra.mxu0 %v1490
    %1967 = vmatprep.subr.bf16.mxu0 0
    %1968 = vmatpush1.bf16.msra.mxu0 %v1491
    %1969 = vmatprep.subr.bf16.mxu0 0
    %1970 = vmatpush1.bf16.msra.mxu0 %v1492
    %1971 = vmatprep.subr.bf16.mxu0 0
    %1972 = vmatpush1.bf16.msra.mxu0 %v1493
    %1973 = vmatprep.subr.bf16.mxu0 0
    %1974 = vmatpush1.bf16.msra.mxu0 %v1494
    %1975 = vmatprep.mubr.bf16.mxu0 %v52
    %1976 = vmatmul.mubr.bf16.gmra.mrb[0].mxu0 %v51
    %v1977 = vpop.f32.mrb[0].mxu0
    %v1978 = vadd.f32 %v549, %v1977
    %v1979 = vpop.f32.mrb[0].mxu0
    %v1980 = vpop.f32.mrb[0].mxu0
    %v1981 = vpop.f32.mrb[0].mxu0
    %1982 = vdwg.mxu0
    %1983 = vmatprep.subr.bf16.mxu0 0
    %1984 = vmatpush1.bf16.msra.mxu0 %v1495
    %1985 = vmatprep.subr.bf16.mxu0 0
    %1986 = vmatpush1.bf16.msra.mxu0 %v1496
    %1987 = vmatprep.subr.bf16.mxu0 0
    %1988 = vmatpush1.bf16.msra.mxu0 %v1497
    %1989 = vmatprep.subr.bf16.mxu0 0
    %1990 = vmatpush1.bf16.msra.mxu0 %v1498
    %1991 = vmatprep.subr.bf16.mxu0 0
    %1992 = vmatpush1.bf16.msra.mxu0 %v1499
    %1993 = vmatprep.subr.bf16.mxu0 0
    %1994 = vmatpush1.bf16.msra.mxu0 %v1500
    %1995 = vmatprep.subr.bf16.mxu0 0
    %1996 = vmatpush1.bf16.msra.mxu0 %v1501
    %1997 = vmatprep.subr.bf16.mxu0 0
    %1998 = vmatpush1.bf16.msra.mxu0 %v1502
    %1999 = vmatprep.subr.bf16.mxu0 0
    %2000 = vmatpush1.bf16.msra.mxu0 %v1503
    %2001 = vmatprep.subr.bf16.mxu0 0
    %2002 = vmatpush1.bf16.msra.mxu0 %v1504
    %2003 = vmatprep.subr.bf16.mxu0 0
    %2004 = vmatpush1.bf16.msra.mxu0 %v1505
    %2005 = vmatprep.subr.bf16.mxu0 0
    %2006 = vmatpush1.bf16.msra.mxu0 %v1506
    %2007 = vmatprep.subr.bf16.mxu0 0
    %2008 = vmatpush1.bf16.msra.mxu0 %v1507
    %2009 = vmatprep.subr.bf16.mxu0 0
    %2010 = vmatpush1.bf16.msra.mxu0 %v1508
    %2011 = vmatprep.subr.bf16.mxu0 0
    %2012 = vmatpush1.bf16.msra.mxu0 %v1509
    %2013 = vmatprep.subr.bf16.mxu0 0
    %2014 = vmatpush1.bf16.msra.mxu0 %v1510
    %2015 = vmatprep.mubr.bf16.mxu0 %v54
    %2016 = vmatmul.mubr.bf16.gmra.mrb[0].mxu0 %v53
    %v2017 = vpop.f32.mrb[0].mxu0
    %v2018 = vadd.f32 %v1978, %v2017
    %v2019 = vpop.f32.mrb[0].mxu0
    %v2020 = vpop.f32.mrb[0].mxu0
    %v2021 = vpop.f32.mrb[0].mxu0
    %2022 = vdwg.mxu0
    %2023 = vmatprep.subr.bf16.mxu0 0
    %2024 = vmatpush1.bf16.msra.mxu0 %v1511
    %2025 = vmatprep.subr.bf16.mxu0 0
    %2026 = vmatpush1.bf16.msra.mxu0 %v1512
    %2027 = vmatprep.subr.bf16.mxu0 0
    %2028 = vmatpush1.bf16.msra.mxu0 %v1513
    %2029 = vmatprep.subr.bf16.mxu0 0
    %2030 = vmatpush1.bf16.msra.mxu0 %v1514
    %2031 = vmatprep.subr.bf16.mxu0 0
    %2032 = vmatpush1.bf16.msra.mxu0 %v1515
    %2033 = vmatprep.subr.bf16.mxu0 0
    %2034 = vmatpush1.bf16.msra.mxu0 %v1516
    %2035 = vmatprep.subr.bf16.mxu0 0
    %2036 = vmatpush1.bf16.msra.mxu0 %v1517
    %2037 = vmatprep.subr.bf16.mxu0 0
    %2038 = vmatpush1.bf16.msra.mxu0 %v1518
    %2039 = vmatprep.subr.bf16.mxu0 0
    %2040 = vmatpush1.bf16.msra.mxu0 %v1519
    %2041 = vmatprep.subr.bf16.mxu0 0
    %2042 = vmatpush1.bf16.msra.mxu0 %v1520
    %2043 = vmatprep.subr.bf16.mxu0 0
    %2044 = vmatpush1.bf16.msra.mxu0 %v1521
    %2045 = vmatprep.subr.bf16.mxu0 0
    %2046 = vmatpush1.bf16.msra.mxu0 %v1522
    %2047 = vmatprep.subr.bf16.mxu0 0
    %2048 = vmatpush1.bf16.msra.mxu0 %v1523
    %2049 = vmatprep.subr.bf16.mxu0 0
    %2050 = vmatpush1.bf16.msra.mxu0 %v1524
    %2051 = vmatprep.subr.bf16.mxu0 0
    %2052 = vmatpush1.bf16.msra.mxu0 %v1525
    %2053 = vmatprep.subr.bf16.mxu0 0
    %2054 = vmatpush1.bf16.msra.mxu0 %v1526
    %2055 = vmatprep.mubr.bf16.mxu0 %v56
    %2056 = vmatmul.mubr.bf16.gmra.mrb[0].mxu0 %v55
    %v2057 = vpop.f32.mrb[0].mxu0
    %v2058 = vadd.f32 %v2018, %v2057
    %v2059 = vpop.f32.mrb[0].mxu0
    %v2060 = vpop.f32.mrb[0].mxu0
    %v2061 = vpop.f32.mrb[0].mxu0
    %2062 = vdwg.mxu0
    %2063 = vmatprep.subr.bf16.mxu0 0
    %2064 = vmatpush1.bf16.msra.mxu0 %v1527
    %2065 = vmatprep.subr.bf16.mxu0 0
    %2066 = vmatpush1.bf16.msra.mxu0 %v1528
    %2067 = vmatprep.subr.bf16.mxu0 0
    %2068 = vmatpush1.bf16.msra.mxu0 %v1529
    %2069 = vmatprep.subr.bf16.mxu0 0
    %2070 = vmatpush1.bf16.msra.mxu0 %v1530
    %2071 = vmatprep.subr.bf16.mxu0 0
    %2072 = vmatpush1.bf16.msra.mxu0 %v1531
    %2073 = vmatprep.subr.bf16.mxu0 0
    %2074 = vmatpush1.bf16.msra.mxu0 %v1532
    %2075 = vmatprep.subr.bf16.mxu0 0
    %2076 = vmatpush1.bf16.msra.mxu0 %v1533
    %2077 = vmatprep.subr.bf16.mxu0 0
    %2078 = vmatpush1.bf16.msra.mxu0 %v1534
    %2079 = vmatprep.subr.bf16.mxu0 0
    %2080 = vmatpush1.bf16.msra.mxu0 %v1535
    %2081 = vmatprep.subr.bf16.mxu0 0
    %2082 = vmatpush1.bf16.msra.mxu0 %v1536
    %2083 = vmatprep.subr.bf16.mxu0 0
    %2084 = vmatpush1.bf16.msra.mxu0 %v1537
    %2085 = vmatprep.subr.bf16.mxu0 0
    %2086 = vmatpush1.bf16.msra.mxu0 %v1538
    %2087 = vmatprep.subr.bf16.mxu0 0
    %2088 = vmatpush1.bf16.msra.mxu0 %v1539
    %2089 = vmatprep.subr.bf16.mxu0 0
    %2090 = vmatpush1.bf16.msra.mxu0 %v1540
    %2091 = vmatprep.subr.bf16.mxu0 0
    %2092 = vmatpush1.bf16.msra.mxu0 %v1541
    %2093 = vmatprep.subr.bf16.mxu0 0
    %2094 = vmatpush1.bf16.msra.mxu0 %v1542
    %2095 = vmatprep.mubr.bf16.mxu0 %v58
    %2096 = vmatmul.mubr.bf16.gmra.mrb[0].mxu0 %v57
    %v2097 = vpop.f32.mrb[0].mxu0
    %v2098 = vadd.f32 %v2058, %v2097
    %v2099 = vpop.f32.mrb[0].mxu0
    %v2100 = vpop.f32.mrb[0].mxu0
    %v2101 = vpop.f32.mrb[0].mxu0
    %2102 = vdwg.mxu0
    %2103 = vmatprep.subr.bf16.mxu0 0
    %2104 = vmatpush1.bf16.msra.mxu0 %v1543
    %2105 = vmatprep.subr.bf16.mxu0 0
    %2106 = vmatpush1.bf16.msra.mxu0 %v1544
    %2107 = vmatprep.subr.bf16.mxu0 0
    %2108 = vmatpush1.bf16.msra.mxu0 %v1545
    %2109 = vmatprep.subr.bf16.mxu0 0
    %2110 = vmatpush1.bf16.msra.mxu0 %v1546
    %2111 = vmatprep.subr.bf16.mxu0 0
    %2112 = vmatpush1.bf16.msra.mxu0 %v1547
    %2113 = vmatprep.subr.bf16.mxu0 0
    %2114 = vmatpush1.bf16.msra.mxu0 %v1548
    %2115 = vmatprep.subr.bf16.mxu0 0
    %2116 = vmatpush1.bf16.msra.mxu0 %v1549
    %2117 = vmatprep.subr.bf16.mxu0 0
    %2118 = vmatpush1.bf16.msra.mxu0 %v1550
    %2119 = vmatprep.subr.bf16.mxu0 0
    %2120 = vmatpush1.bf16.msra.mxu0 %v1551
    %2121 = vmatprep.subr.bf16.mxu0 0
    %2122 = vmatpush1.bf16.msra.mxu0 %v1552
    %2123 = vmatprep.subr.bf16.mxu0 0
    %2124 = vmatpush1.bf16.msra.mxu0 %v1553
    %2125 = vmatprep.subr.bf16.mxu0 0
    %2126 = vmatpush1.bf16.msra.mxu0 %v1554
    %2127 = vmatprep.subr.bf16.mxu0 0
    %2128 = vmatpush1.bf16.msra.mxu0 %v1555
    %2129 = vmatprep.subr.bf16.mxu0 0
    %2130 = vmatpush1.bf16.msra.mxu0 %v1556
    %2131 = vmatprep.subr.bf16.mxu0 0
    %2132 = vmatpush1.bf16.msra.mxu0 %v1557
    %2133 = vmatprep.subr.bf16.mxu0 0
    %2134 = vmatpush1.bf16.msra.mxu0 %v1558
    %2135 = vmatprep.mubr.bf16.mxu0 %v60
    %2136 = vmatmul.mubr.bf16.gmra.mrb[0].mxu0 %v59
    %v2137 = vpop.f32.mrb[0].mxu0
    %v2138 = vadd.f32 %v2098, %v2137
    %v2139 = vpop.f32.mrb[0].mxu0
    %v2140 = vpop.f32.mrb[0].mxu0
    %v2141 = vpop.f32.mrb[0].mxu0
    %2142 = vdwg.mxu0
    %2143 = vmatprep.subr.bf16.mxu0 0
    %2144 = vmatpush1.bf16.msra.mxu0 %v1559
    %2145 = vmatprep.subr.bf16.mxu0 0
    %2146 = vmatpush1.bf16.msra.mxu0 %v1560
    %2147 = vmatprep.subr.bf16.mxu0 0
    %2148 = vmatpush1.bf16.msra.mxu0 %v1561
    %2149 = vmatprep.subr.bf16.mxu0 0
    %2150 = vmatpush1.bf16.msra.mxu0 %v1562
    %2151 = vmatprep.subr.bf16.mxu0 0
    %2152 = vmatpush1.bf16.msra.mxu0 %v1563
    %2153 = vmatprep.subr.bf16.mxu0 0
    %2154 = vmatpush1.bf16.msra.mxu0 %v1564
    %2155 = vmatprep.subr.bf16.mxu0 0
    %2156 = vmatpush1.bf16.msra.mxu0 %v1565
    %2157 = vmatprep.subr.bf16.mxu0 0
    %2158 = vmatpush1.bf16.msra.mxu0 %v1566
    %2159 = vmatprep.subr.bf16.mxu0 0
    %2160 = vmatpush1.bf16.msra.mxu0 %v1567
    %2161 = vmatprep.subr.bf16.mxu0 0
    %2162 = vmatpush1.bf16.msra.mxu0 %v1568
    %2163 = vmatprep.subr.bf16.mxu0 0
    %2164 = vmatpush1.bf16.msra.mxu0 %v1569
    %2165 = vmatprep.subr.bf16.mxu0 0
    %2166 = vmatpush1.bf16.msra.mxu0 %v1570
    %2167 = vmatprep.subr.bf16.mxu0 0
    %2168 = vmatpush1.bf16.msra.mxu0 %v1571
    %2169 = vmatprep.subr.bf16.mxu0 0
    %2170 = vmatpush1.bf16.msra.mxu0 %v1572
    %2171 = vmatprep.subr.bf16.mxu0 0
    %2172 = vmatpush1.bf16.msra.mxu0 %v1573
    %2173 = vmatprep.subr.bf16.mxu0 0
    %2174 = vmatpush1.bf16.msra.mxu0 %v1574
    %2175 = vmatprep.mubr.bf16.mxu0 %v62
    %2176 = vmatmul.mubr.bf16.gmra.mrb[0].mxu0 %v61
    %v2177 = vpop.f32.mrb[0].mxu0
    %v2178 = vadd.f32 %v2138, %v2177
    %v2179 = vpop.f32.mrb[0].mxu0
    %v2180 = vpop.f32.mrb[0].mxu0
    %v2181 = vpop.f32.mrb[0].mxu0
    %2182 = vdwg.mxu0
    %2183 = vmatprep.subr.bf16.mxu0 0
    %2184 = vmatpush1.bf16.msra.mxu0 %v1575
    %2185 = vmatprep.subr.bf16.mxu0 0
    %2186 = vmatpush1.bf16.msra.mxu0 %v1576
    %2187 = vmatprep.subr.bf16.mxu0 0
    %2188 = vmatpush1.bf16.msra.mxu0 %v1577
    %2189 = vmatprep.subr.bf16.mxu0 0
    %2190 = vmatpush1.bf16.msra.mxu0 %v1578
    %2191 = vmatprep.subr.bf16.mxu0 0
    %2192 = vmatpush1.bf16.msra.mxu0 %v1579
    %2193 = vmatprep.subr.bf16.mxu0 0
    %2194 = vmatpush1.bf16.msra.mxu0 %v1580
    %2195 = vmatprep.subr.bf16.mxu0 0
    %2196 = vmatpush1.bf16.msra.mxu0 %v1581
    %2197 = vmatprep.subr.bf16.mxu0 0
    %2198 = vmatpush1.bf16.msra.mxu0 %v1582
    %2199 = vmatprep.subr.bf16.mxu0 0
    %2200 = vmatpush1.bf16.msra.mxu0 %v1583
    %2201 = vmatprep.subr.bf16.mxu0 0
    %2202 = vmatpush1.bf16.msra.mxu0 %v1584
    %2203 = vmatprep.subr.bf16.mxu0 0
    %2204 = vmatpush1.bf16.msra.mxu0 %v1585
    %2205 = vmatprep.subr.bf16.mxu0 0
    %2206 = vmatpush1.bf16.msra.mxu0 %v1586
    %2207 = vmatprep.subr.bf16.mxu0 0
    %2208 = vmatpush1.bf16.msra.mxu0 %v1587
    %2209 = vmatprep.subr.bf16.mxu0 0
    %2210 = vmatpush1.bf16.msra.mxu0 %v1588
    %2211 = vmatprep.subr.bf16.mxu0 0
    %2212 = vmatpush1.bf16.msra.mxu0 %v1589
    %2213 = vmatprep.subr.bf16.mxu0 0
    %2214 = vmatpush1.bf16.msra.mxu0 %v1590
    %2215 = vmatprep.mubr.bf16.mxu0 %v64
    %2216 = vmatmul.mubr.bf16.gmra.mrb[0].mxu0 %v63
    %v2217 = vpop.f32.mrb[0].mxu0
    %v2218 = vadd.f32 %v2178, %v2217
    %v2219 = vpop.f32.mrb[0].mxu0
    %v2220 = vpop.f32.mrb[0].mxu0
    %v2221 = vpop.f32.mrb[0].mxu0
    %2222 = vdwg.mxu0
    %2223 = vmatprep.subr.bf16.mxu0 0
    %2224 = vmatpush1.bf16.msra.mxu0 %v1591
    %2225 = vmatprep.subr.bf16.mxu0 0
    %2226 = vmatpush1.bf16.msra.mxu0 %v1592
    %2227 = vmatprep.subr.bf16.mxu0 0
    %2228 = vmatpush1.bf16.msra.mxu0 %v1593
    %2229 = vmatprep.subr.bf16.mxu0 0
    %2230 = vmatpush1.bf16.msra.mxu0 %v1594
    %2231 = vmatprep.subr.bf16.mxu0 0
    %2232 = vmatpush1.bf16.msra.mxu0 %v1595
    %2233 = vmatprep.subr.bf16.mxu0 0
    %2234 = vmatpush1.bf16.msra.mxu0 %v1596
    %2235 = vmatprep.subr.bf16.mxu0 0
    %2236 = vmatpush1.bf16.msra.mxu0 %v1597
    %2237 = vmatprep.subr.bf16.mxu0 0
    %2238 = vmatpush1.bf16.msra.mxu0 %v1598
    %2239 = vmatprep.subr.bf16.mxu0 0
    %2240 = vmatpush1.bf16.msra.mxu0 %v1599
    %2241 = vmatprep.subr.bf16.mxu0 0
    %2242 = vmatpush1.bf16.msra.mxu0 %v1600
    %2243 = vmatprep.subr.bf16.mxu0 0
    %2244 = vmatpush1.bf16.msra.mxu0 %v1601
    %2245 = vmatprep.subr.bf16.mxu0 0
    %2246 = vmatpush1.bf16.msra.mxu0 %v1602
    %2247 = vmatprep.subr.bf16.mxu0 0
    %2248 = vmatpush1.bf16.msra.mxu0 %v1603
    %2249 = vmatprep.subr.bf16.mxu0 0
    %2250 = vmatpush1.bf16.msra.mxu0 %v1604
    %2251 = vmatprep.subr.bf16.mxu0 0
    %2252 = vmatpush1.bf16.msra.mxu0 %v1605
    %2253 = vmatprep.subr.bf16.mxu0 0
    %2254 = vmatpush1.bf16.msra.mxu0 %v1606
    %2255 = vmatprep.mubr.bf16.mxu0 %v66
    %2256 = vmatmul.mubr.bf16.gmra.mrb[0].mxu0 %v65
    %v2257 = vpop.f32.mrb[0].mxu0
    %v2258 = vadd.f32 %v2218, %v2257
    %v2259 = vpop.f32.mrb[0].mxu0
    %v2260 = vpop.f32.mrb[0].mxu0
    %v2261 = vpop.f32.mrb[0].mxu0
    %2262 = vdwg.mxu0
    %2263 = vmatprep.subr.bf16.mxu0 0
    %2264 = vmatpush1.bf16.msra.mxu0 %v1607
    %2265 = vmatprep.subr.bf16.mxu0 0
    %2266 = vmatpush1.bf16.msra.mxu0 %v1608
    %2267 = vmatprep.subr.bf16.mxu0 0
    %2268 = vmatpush1.bf16.msra.mxu0 %v1609
    %2269 = vmatprep.subr.bf16.mxu0 0
    %2270 = vmatpush1.bf16.msra.mxu0 %v1610
    %2271 = vmatprep.subr.bf16.mxu0 0
    %2272 = vmatpush1.bf16.msra.mxu0 %v1611
    %2273 = vmatprep.subr.bf16.mxu0 0
    %2274 = vmatpush1.bf16.msra.mxu0 %v1612
    %2275 = vmatprep.subr.bf16.mxu0 0
    %2276 = vmatpush1.bf16.msra.mxu0 %v1613
    %2277 = vmatprep.subr.bf16.mxu0 0
    %2278 = vmatpush1.bf16.msra.mxu0 %v1614
    %2279 = vmatprep.subr.bf16.mxu0 0
    %2280 = vmatpush1.bf16.msra.mxu0 %v1615
    %2281 = vmatprep.subr.bf16.mxu0 0
    %2282 = vmatpush1.bf16.msra.mxu0 %v1616
    %2283 = vmatprep.subr.bf16.mxu0 0
    %2284 = vmatpush1.bf16.msra.mxu0 %v1617
    %2285 = vmatprep.subr.bf16.mxu0 0
    %2286 = vmatpush1.bf16.msra.mxu0 %v1618
    %2287 = vmatprep.subr.bf16.mxu0 0
    %2288 = vmatpush1.bf16.msra.mxu0 %v1619
    %2289 = vmatprep.subr.bf16.mxu0 0
    %2290 = vmatpush1.bf16.msra.mxu0 %v1620
    %2291 = vmatprep.subr.bf16.mxu0 0
    %2292 = vmatpush1.bf16.msra.mxu0 %v1621
    %2293 = vmatprep.subr.bf16.mxu0 0
    %2294 = vmatpush1.bf16.msra.mxu0 %v1622
    %2295 = vmatprep.mubr.bf16.mxu0 %v68
    %2296 = vmatmul.mubr.bf16.gmra.mrb[0].mxu0 %v67
    %v2297 = vpop.f32.mrb[0].mxu0
    %v2298 = vadd.f32 %v2258, %v2297
    %v2299 = vpop.f32.mrb[0].mxu0
    %v2300 = vpop.f32.mrb[0].mxu0
    %v2301 = vpop.f32.mrb[0].mxu0
    %2302 = vdwg.mxu0
    %2303 = vmatprep.subr.bf16.mxu0 0
    %2304 = vmatpush1.bf16.msra.mxu0 %v1623
    %2305 = vmatprep.subr.bf16.mxu0 0
    %2306 = vmatpush1.bf16.msra.mxu0 %v1624
    %2307 = vmatprep.subr.bf16.mxu0 0
    %2308 = vmatpush1.bf16.msra.mxu0 %v1625
    %2309 = vmatprep.subr.bf16.mxu0 0
    %2310 = vmatpush1.bf16.msra.mxu0 %v1626
    %2311 = vmatprep.subr.bf16.mxu0 0
    %2312 = vmatpush1.bf16.msra.mxu0 %v1627
    %2313 = vmatprep.subr.bf16.mxu0 0
    %2314 = vmatpush1.bf16.msra.mxu0 %v1628
    %2315 = vmatprep.subr.bf16.mxu0 0
    %2316 = vmatpush1.bf16.msra.mxu0 %v1629
    %2317 = vmatprep.subr.bf16.mxu0 0
    %2318 = vmatpush1.bf16.msra.mxu0 %v1630
    %2319 = vmatprep.subr.bf16.mxu0 0
    %2320 = vmatpush1.bf16.msra.mxu0 %v1631
    %2321 = vmatprep.subr.bf16.mxu0 0
    %2322 = vmatpush1.bf16.msra.mxu0 %v1632
    %2323 = vmatprep.subr.bf16.mxu0 0
    %2324 = vmatpush1.bf16.msra.mxu0 %v1633
    %2325 = vmatprep.subr.bf16.mxu0 0
    %2326 = vmatpush1.bf16.msra.mxu0 %v1634
    %2327 = vmatprep.subr.bf16.mxu0 0
    %2328 = vmatpush1.bf16.msra.mxu0 %v1635
    %2329 = vmatprep.subr.bf16.mxu0 0
    %2330 = vmatpush1.bf16.msra.mxu0 %v1636
    %2331 = vmatprep.subr.bf16.mxu0 0
    %2332 = vmatpush1.bf16.msra.mxu0 %v1637
    %2333 = vmatprep.subr.bf16.mxu0 0
    %2334 = vmatpush1.bf16.msra.mxu0 %v1638
    %2335 = vmatprep.mubr.bf16.mxu0 %v70
    %2336 = vmatmul.mubr.bf16.gmra.mrb[0].mxu0 %v69
    %v2337 = vpop.f32.mrb[0].mxu0
    %v2338 = vadd.f32 %v2298, %v2337
    %v2339 = vpop.f32.mrb[0].mxu0
    %v2340 = vpop.f32.mrb[0].mxu0
    %v2341 = vpop.f32.mrb[0].mxu0
    %2342 = vdwg.mxu0
    %2343 = vmatprep.subr.bf16.mxu0 0
    %2344 = vmatpush1.bf16.msra.mxu0 %v1639
    %2345 = vmatprep.subr.bf16.mxu0 0
    %2346 = vmatpush1.bf16.msra.mxu0 %v1640
    %2347 = vmatprep.subr.bf16.mxu0 0
    %2348 = vmatpush1.bf16.msra.mxu0 %v1641
    %2349 = vmatprep.subr.bf16.mxu0 0
    %2350 = vmatpush1.bf16.msra.mxu0 %v1642
    %2351 = vmatprep.subr.bf16.mxu0 0
    %2352 = vmatpush1.bf16.msra.mxu0 %v1643
    %2353 = vmatprep.subr.bf16.mxu0 0
    %2354 = vmatpush1.bf16.msra.mxu0 %v1644
    %2355 = vmatprep.subr.bf16.mxu0 0
    %2356 = vmatpush1.bf16.msra.mxu0 %v1645
    %2357 = vmatprep.subr.bf16.mxu0 0
    %2358 = vmatpush1.bf16.msra.mxu0 %v1646
    %2359 = vmatprep.subr.bf16.mxu0 0
    %2360 = vmatpush1.bf16.msra.mxu0 %v1647
    %2361 = vmatprep.subr.bf16.mxu0 0
    %2362 = vmatpush1.bf16.msra.mxu0 %v1648
    %2363 = vmatprep.subr.bf16.mxu0 0
    %2364 = vmatpush1.bf16.msra.mxu0 %v1649
    %2365 = vmatprep.subr.bf16.mxu0 0
    %2366 = vmatpush1.bf16.msra.mxu0 %v1650
    %2367 = vmatprep.subr.bf16.mxu0 0
    %2368 = vmatpush1.bf16.msra.mxu0 %v1651
    %2369 = vmatprep.subr.bf16.mxu0 0
    %2370 = vmatpush1.bf16.msra.mxu0 %v1652
    %2371 = vmatprep.subr.bf16.mxu0 0
    %2372 = vmatpush1.bf16.msra.mxu0 %v1653
    %2373 = vmatprep.subr.bf16.mxu0 0
    %2374 = vmatpush1.bf16.msra.mxu0 %v1654
    %2375 = vmatprep.mubr.bf16.mxu0 %v72
    %2376 = vmatmul.mubr.bf16.gmra.mrb[0].mxu0 %v71
    %v2377 = vpop.f32.mrb[0].mxu0
    %v2378 = vadd.f32 %v2338, %v2377
    %v2379 = vpop.f32.mrb[0].mxu0
    %v2380 = vpop.f32.mrb[0].mxu0
    %v2381 = vpop.f32.mrb[0].mxu0
    %2382 = vdwg.mxu0
    %2383 = vmatprep.subr.bf16.mxu0 0
    %2384 = vmatpush1.bf16.msra.mxu0 %v1655
    %2385 = vmatprep.subr.bf16.mxu0 0
    %2386 = vmatpush1.bf16.msra.mxu0 %v1656
    %2387 = vmatprep.subr.bf16.mxu0 0
    %2388 = vmatpush1.bf16.msra.mxu0 %v1657
    %2389 = vmatprep.subr.bf16.mxu0 0
    %2390 = vmatpush1.bf16.msra.mxu0 %v1658
    %2391 = vmatprep.subr.bf16.mxu0 0
    %2392 = vmatpush1.bf16.msra.mxu0 %v1659
    %2393 = vmatprep.subr.bf16.mxu0 0
    %2394 = vmatpush1.bf16.msra.mxu0 %v1660
    %2395 = vmatprep.subr.bf16.mxu0 0
    %2396 = vmatpush1.bf16.msra.mxu0 %v1661
    %2397 = vmatprep.subr.bf16.mxu0 0
    %2398 = vmatpush1.bf16.msra.mxu0 %v1662
    %2399 = vmatprep.subr.bf16.mxu0 0
    %2400 = vmatpush1.bf16.msra.mxu0 %v1663
    %2401 = vmatprep.subr.bf16.mxu0 0
    %2402 = vmatpush1.bf16.msra.mxu0 %v1664
    %2403 = vmatprep.subr.bf16.mxu0 0
    %2404 = vmatpush1.bf16.msra.mxu0 %v1665
    %2405 = vmatprep.subr.bf16.mxu0 0
    %2406 = vmatpush1.bf16.msra.mxu0 %v1666
    %2407 = vmatprep.subr.bf16.mxu0 0
    %2408 = vmatpush1.bf16.msra.mxu0 %v1667
    %2409 = vmatprep.subr.bf16.mxu0 0
    %2410 = vmatpush1.bf16.msra.mxu0 %v1668
    %2411 = vmatprep.subr.bf16.mxu0 0
    %2412 = vmatpush1.bf16.msra.mxu0 %v1669
    %2413 = vmatprep.subr.bf16.mxu0 0
    %2414 = vmatpush1.bf16.msra.mxu0 %v1670
    %2415 = vmatprep.mubr.bf16.mxu0 %v74
    %2416 = vmatmul.mubr.bf16.gmra.mrb[0].mxu0 %v73
    %v2417 = vpop.f32.mrb[0].mxu0
    %v2418 = vadd.f32 %v2378, %v2417
    %v2419 = vpop.f32.mrb[0].mxu0
    %v2420 = vpop.f32.mrb[0].mxu0
    %v2421 = vpop.f32.mrb[0].mxu0
    %2422 = vdwg.mxu0
    %2423 = vmatprep.subr.bf16.mxu0 0
    %2424 = vmatpush1.bf16.msra.mxu0 %v1671
    %2425 = vmatprep.subr.bf16.mxu0 0
    %2426 = vmatpush1.bf16.msra.mxu0 %v1672
    %2427 = vmatprep.subr.bf16.mxu0 0
    %2428 = vmatpush1.bf16.msra.mxu0 %v1673
    %2429 = vmatprep.subr.bf16.mxu0 0
    %2430 = vmatpush1.bf16.msra.mxu0 %v1674
    %2431 = vmatprep.subr.bf16.mxu0 0
    %2432 = vmatpush1.bf16.msra.mxu0 %v1675
    %2433 = vmatprep.subr.bf16.mxu0 0
    %2434 = vmatpush1.bf16.msra.mxu0 %v1676
    %2435 = vmatprep.subr.bf16.mxu0 0
    %2436 = vmatpush1.bf16.msra.mxu0 %v1677
    %2437 = vmatprep.subr.bf16.mxu0 0
    %2438 = vmatpush1.bf16.msra.mxu0 %v1678
    %2439 = vmatprep.subr.bf16.mxu0 0
    %2440 = vmatpush1.bf16.msra.mxu0 %v1679
    %2441 = vmatprep.subr.bf16.mxu0 0
    %2442 = vmatpush1.bf16.msra.mxu0 %v1680
    %2443 = vmatprep.subr.bf16.mxu0 0
    %2444 = vmatpush1.bf16.msra.mxu0 %v1681
    %2445 = vmatprep.subr.bf16.mxu0 0
    %2446 = vmatpush1.bf16.msra.mxu0 %v1682
    %2447 = vmatprep.subr.bf16.mxu0 0
    %2448 = vmatpush1.bf16.msra.mxu0 %v1683
    %2449 = vmatprep.subr.bf16.mxu0 0
    %2450 = vmatpush1.bf16.msra.mxu0 %v1684
    %2451 = vmatprep.subr.bf16.mxu0 0
    %2452 = vmatpush1.bf16.msra.mxu0 %v1685
    %2453 = vmatprep.subr.bf16.mxu0 0
    %2454 = vmatpush1.bf16.msra.mxu0 %v1686
    %2455 = vmatprep.mubr.bf16.mxu0 %v76
    %2456 = vmatmul.mubr.bf16.gmra.mrb[0].mxu0 %v75
    %v2457 = vpop.f32.mrb[0].mxu0
    %v2458 = vadd.f32 %v2418, %v2457
    %v2459 = vpop.f32.mrb[0].mxu0
    %v2460 = vpop.f32.mrb[0].mxu0
    %v2461 = vpop.f32.mrb[0].mxu0
    %2462 = vdwg.mxu0
    %2463 = vmatprep.subr.bf16.mxu0 0
    %2464 = vmatpush1.bf16.msra.mxu0 %v1687
    %2465 = vmatprep.subr.bf16.mxu0 0
    %2466 = vmatpush1.bf16.msra.mxu0 %v1688
    %2467 = vmatprep.subr.bf16.mxu0 0
    %2468 = vmatpush1.bf16.msra.mxu0 %v1689
    %2469 = vmatprep.subr.bf16.mxu0 0
    %2470 = vmatpush1.bf16.msra.mxu0 %v1690
    %2471 = vmatprep.subr.bf16.mxu0 0
    %2472 = vmatpush1.bf16.msra.mxu0 %v1691
    %2473 = vmatprep.subr.bf16.mxu0 0
    %2474 = vmatpush1.bf16.msra.mxu0 %v1692
    %2475 = vmatprep.subr.bf16.mxu0 0
    %2476 = vmatpush1.bf16.msra.mxu0 %v1693
    %2477 = vmatprep.subr.bf16.mxu0 0
    %2478 = vmatpush1.bf16.msra.mxu0 %v1694
    %2479 = vmatprep.subr.bf16.mxu0 0
    %2480 = vmatpush1.bf16.msra.mxu0 %v1695
    %2481 = vmatprep.subr.bf16.mxu0 0
    %2482 = vmatpush1.bf16.msra.mxu0 %v1696
    %2483 = vmatprep.subr.bf16.mxu0 0
    %2484 = vmatpush1.bf16.msra.mxu0 %v1697
    %2485 = vmatprep.subr.bf16.mxu0 0
    %2486 = vmatpush1.bf16.msra.mxu0 %v1698
    %2487 = vmatprep.subr.bf16.mxu0 0
    %2488 = vmatpush1.bf16.msra.mxu0 %v1699
    %2489 = vmatprep.subr.bf16.mxu0 0
    %2490 = vmatpush1.bf16.msra.mxu0 %v1700
    %2491 = vmatprep.subr.bf16.mxu0 0
    %2492 = vmatpush1.bf16.msra.mxu0 %v1701
    %2493 = vmatprep.subr.bf16.mxu0 0
    %2494 = vmatpush1.bf16.msra.mxu0 %v1702
    %2495 = vmatprep.mubr.bf16.mxu0 %v78
    %2496 = vmatmul.mubr.bf16.gmra.mrb[0].mxu0 %v77
    %v2497 = vpop.f32.mrb[0].mxu0
    %v2498 = vadd.f32 %v2458, %v2497
    %v2499 = vpop.f32.mrb[0].mxu0
    %v2500 = vpop.f32.mrb[0].mxu0
    %v2501 = vpop.f32.mrb[0].mxu0
    %2502 = vdwg.mxu0
    %2503 = vmatprep.subr.bf16.mxu0 0
    %2504 = vmatpush1.bf16.msra.mxu0 %v1703
    %2505 = vmatprep.subr.bf16.mxu0 0
    %2506 = vmatpush1.bf16.msra.mxu0 %v1704
    %2507 = vmatprep.subr.bf16.mxu0 0
    %2508 = vmatpush1.bf16.msra.mxu0 %v1705
    %2509 = vmatprep.subr.bf16.mxu0 0
    %2510 = vmatpush1.bf16.msra.mxu0 %v1706
    %2511 = vmatprep.subr.bf16.mxu0 0
    %2512 = vmatpush1.bf16.msra.mxu0 %v1707
    %2513 = vmatprep.subr.bf16.mxu0 0
    %2514 = vmatpush1.bf16.msra.mxu0 %v1708
    %2515 = vmatprep.subr.bf16.mxu0 0
    %2516 = vmatpush1.bf16.msra.mxu0 %v1709
    %2517 = vmatprep.subr.bf16.mxu0 0
    %2518 = vmatpush1.bf16.msra.mxu0 %v1710
    %2519 = vmatprep.subr.bf16.mxu0 0
    %2520 = vmatpush1.bf16.msra.mxu0 0
    %2521 = vmatprep.subr.bf16.mxu0 0
    %2522 = vmatpush1.bf16.msra.mxu0 0
    %2523 = vmatprep.subr.bf16.mxu0 0
    %2524 = vmatpush1.bf16.msra.mxu0 0
    %2525 = vmatprep.subr.bf16.mxu0 0
    %2526 = vmatpush1.bf16.msra.mxu0 0
    %2527 = vmatprep.subr.bf16.mxu0 0
    %2528 = vmatpush1.bf16.msra.mxu0 0
    %2529 = vmatprep.subr.bf16.mxu0 0
    %2530 = vmatpush1.bf16.msra.mxu0 0
    %2531 = vmatprep.subr.bf16.mxu0 0
    %2532 = vmatpush1.bf16.msra.mxu0 0
    %2533 = vmatprep.subr.bf16.mxu0 0
    %2534 = vmatpush1.bf16.msra.mxu0 0
    %2535 = vmatprep.mubr.bf16.mxu0 0
    %2536 = vmatmul.mubr.bf16.gmra.mrb[0].mxu0 %v79
    %v2537 = vpop.f32.mrb[0].mxu0
    %v2538 = vadd.f32 %v2498, %v2537
    %v2539 = vpop.f32.mrb[0].mxu0
    %v2540 = vpop.f32.mrb[0].mxu0
    %v2541 = vpop.f32.mrb[0].mxu0
    %2542 = vdwg.mxu0
    %v2543 = vtanh.pop %v2538
    %v2544 = vpack.c.bf16 %v2543, %v2543
    %v2545 = vld [vmem:[%s3] sm:$0xf]
    %v2546 = vld [vmem:[%s3 + $0x4] sm:$0xf]
    %v2547 = vld [vmem:[%s3 + $0x8] sm:$0xf]
    %v2548 = vld [vmem:[%s3 + $0xc] sm:$0xf]
    %v2549 = vld [vmem:[%s4] sm:$0x1]
    %v2551 = vlaneseq
    %v2552 = vshrl.u32 %v2551, 7
    %v2553 = vsub.s32 0, %v2552
    %v2554 = vrot.slane %v2549, %v2553
    %v2560 = vunpack.c.l.b16 %v2545
    %v2561 = vunpack.c.l.b16 %v2546
    %v2562 = vunpack.c.l.b16 %v2547
    %v2563 = vunpack.c.l.b16 %v2548
    %v2564 = vpack.c.b16 %v2561, %v2560
    %v2565 = vpack.c.b16 %v2563, %v2562
    %vm2568 = vcmask 261120
    %v2570 = vsel %vm2568, %v2544, 0
    %2572 = vmatprep.subr.bf16.mxu0 0
    %2573 = vmatpush1.bf16.msra.mxu0 %v2564
    %2574 = vmatprep.subr.bf16.mxu0 0
    %2575 = vmatpush1.bf16.msra.mxu0 %v2565
    %2576 = vmatprep.subr.bf16.mxu0 0
    %2577 = vmatpush1.bf16.msra.mxu0 0
    %2578 = vmatprep.subr.bf16.mxu0 0
    %2579 = vmatpush1.bf16.msra.mxu0 0
    %2580 = vmatprep.subr.bf16.mxu0 0
    %2581 = vmatpush1.bf16.msra.mxu0 0
    %2582 = vmatprep.subr.bf16.mxu0 0
    %2583 = vmatpush1.bf16.msra.mxu0 0
    %2584 = vmatprep.subr.bf16.mxu0 0
    %2585 = vmatpush1.bf16.msra.mxu0 0
    %2586 = vmatprep.subr.bf16.mxu0 0
    %2587 = vmatpush1.bf16.msra.mxu0 0
    %2588 = vmatprep.subr.bf16.mxu0 0
    %2589 = vmatpush1.bf16.msra.mxu0 0
    %2590 = vmatprep.subr.bf16.mxu0 0
    %2591 = vmatpush1.bf16.msra.mxu0 0
    %2592 = vmatprep.subr.bf16.mxu0 0
    %2593 = vmatpush1.bf16.msra.mxu0 0
    %2594 = vmatprep.subr.bf16.mxu0 0
    %2595 = vmatpush1.bf16.msra.mxu0 0
    %2596 = vmatprep.subr.bf16.mxu0 0
    %2597 = vmatpush1.bf16.msra.mxu0 0
    %2598 = vmatprep.subr.bf16.mxu0 0
    %2599 = vmatpush1.bf16.msra.mxu0 0
    %2600 = vmatprep.subr.bf16.mxu0 0
    %2601 = vmatpush1.bf16.msra.mxu0 0
    %2602 = vmatprep.subr.bf16.mxu0 0
    %2603 = vmatpush1.bf16.msra.mxu0 0
    %2604 = vmatprep.mubr.bf16.mxu0 0
    %2605 = vmatmul.mubr.bf16.gmra.mrb[0].mxu0 %v2570
    %v2606 = vpop.f32.mrb[0].mxu0
    %v2607 = vadd.f32 %v2554, %v2606
    %v2608 = vpop.f32.mrb[0].mxu0
    %v2609 = vpop.f32.mrb[0].mxu0
    %v2610 = vpop.f32.mrb[0].mxu0
    %2611 = vdwg.mxu0
    %2612 = vst [vmem:[#allocation2] sm:$0xff] %v2607
    // Predicated region
    $region22: #{tpu_custom_call.1} parent=1 // pred_check
      _
    $region23: #{tpu_custom_call.1} parent=1 // pred_check_branch
      %2614 = sbr.rel (0) target = $region25
    $region24: #{tpu_custom_call.1} parent=1 // pred_region
      %s2616 = ssub.s32 128, 128
      %2617 = vsyncadd [#allocation3], %s2616
      %s2619 = sshll.u32 [#allocation2], 4
      %s2620 = int_to_ptr.vmem [resolvable:$true] %s2619
      %2622 = dma.vmem_to_hbm [thread:$0]  %s2620, 128, %s5, [#allocation3]
    $region25: #{tpu_custom_call.1} parent=1 // pred_fallthru
      _
    // Predicated region
    $region26: #{tpu_custom_call.1} parent=1 // pred_check
      _
    $region27: #{tpu_custom_call.1} parent=1 // pred_check_branch
      %2624 = sbr.rel (0) target = $region29
    $region28: #{tpu_custom_call.1} parent=1 // pred_region
      %2625 = dma.done [#allocation3], 128
    $region29: #{tpu_custom_call.1} parent=1 // pred_fallthru
      _
    %2626 = vsyncpa [#allocation3], 1

</llo_original>
